<compile_context>
chip_gen: v6e
topology: v6e:2x2x1
jax: 0.10.0
libtpu: 0.0.40
codegen_flags: <defaults>
</compile_context>

<pallas_src>
import functools
import numpy as np
import jax
import jax.numpy as jnp
from jax.experimental import pallas as pl
from jax.experimental.pallas import tpu as pltpu

INV_PI = 0.31830988618
PI_over_2 = 1.57079632679
PI_over_4 = 0.78539816339

_LOG_EPS = float(np.log(1e-5))
_LOG_INVPI_EPS = float(np.log(INV_PI + 1e-5))
_LOG2PI_TERM = float(-0.5 * 2.0 * np.log(2.0 * np.pi))   # event dim == 2


def _gmm_weighted_cond_kernel(in_ref, out_ref, *, n_modes):
    """in_ref: (F, TR, L) packed features; out_ref: (3, TR, L) = [z_x, z_y, log_p].

    Packed feature rows (F = 5K + 6); the sample index fills the full (TR, L)
    (sublane, lane) plane so every op runs on dense (8,128) vregs:
      [0, 2K)        loc        ordered [k0_x, k0_y, k1_x, k1_y, ...]
      [2K, 4K)       log_scale  same ordering
      [4K, 5K]       mixture weights (row 5K = Lambert weight)
      5K+1           rdn  (uniform branch selector)
      5K+2, 5K+3     eps  (standard normal, Gaussian branch)
      5K+4, 5K+5     wo   (uniform, Lambert lobe)
    """
    K = n_modes
    LOC, LS, W, RDN, EPS, WO = 0, 2 * K, 4 * K, 5 * K + 1, 5 * K + 2, 5 * K + 4

    def row(i):
        return in_ref[i, :, :]

    w_last = row(W + K)
    lmask = row(RDN) < w_last

    # ---- Lambertian lobe (concentric-disk mapping), computed for every sample ----
    wox = row(WO) * 2.0 - 1.0
    woy = row(WO + 1) * 2.0 - 1.0
    nonzero = jnp.logical_or(wox != 0.0, woy != 0.0)
    cond1 = jnp.logical_and(jnp.abs(wox) > jnp.abs(woy), nonzero)
    safe_wox = jnp.where(wox == 0.0, 1.0, wox)
    safe_woy = jnp.where(woy == 0.0, 1.0, woy)
    theta = jnp.where(cond1,
                      PI_over_4 * woy / safe_wox,
                      PI_over_2 - PI_over_4 * wox / safe_woy)
    r = jnp.where(cond1, wox, woy)
    zl_x = jnp.where(nonzero, r * jnp.cos(theta), 0.0)
    zl_y = jnp.where(nonzero, r * jnp.sin(theta), 0.0)

    # ---- Gaussian branch: eps * sum_k exp(log_scale_k) + sum_k loc_k ----
    loc_rows = [row(LOC + i) for i in range(2 * K)]
    ls_rows = [row(LS + i) for i in range(2 * K)]
    scale_rows = [jnp.exp(v) for v in ls_rows]              # EUP
    inv_var_rows = [jnp.exp(-2.0 * v) for v in ls_rows]     # EUP; replaces 2K divides

    scale_sum_x, scale_sum_y = scale_rows[0], scale_rows[1]
    loc_sum_x, loc_sum_y = loc_rows[0], loc_rows[1]
    for k in range(1, K):
        scale_sum_x = scale_sum_x + scale_rows[2 * k]
        scale_sum_y = scale_sum_y + scale_rows[2 * k + 1]
        loc_sum_x = loc_sum_x + loc_rows[2 * k]
        loc_sum_y = loc_sum_y + loc_rows[2 * k + 1]
    zg_x = row(EPS) * scale_sum_x + loc_sum_x
    zg_y = row(EPS + 1) * scale_sum_y + loc_sum_y

    # ---- Select branch and write the sample ----
    z_x = jnp.where(lmask, zl_x, zg_x)
    z_y = jnp.where(lmask, zl_y, zg_y)
    out_ref[0, :, :] = z_x
    out_ref[1, :, :] = z_y

    # ---- Mixture log-density: K Gaussian components + Lambert component ----
    comps = []
    for k in range(K):
        dx = z_x - loc_rows[2 * k]
        dy = z_y - loc_rows[2 * k + 1]
        quad = dx * dx * inv_var_rows[2 * k] + dy * dy * inv_var_rows[2 * k + 1]
        sum_ls = ls_rows[2 * k] + ls_rows[2 * k + 1]
        comps.append(_LOG2PI_TERM + jnp.log(row(W + k) + 1e-5) - 0.5 * quad - sum_ls)
    # TODO(synk): if profiling shows the EUP slot saturated, pass log(w + 1e-5) from the
    # wrapper instead of taking the K+1 logs here (+1 packed input row of HBM traffic).

    # Lambert pdf takes only two compile-time constants -> constant select, no EUP log.
    r2 = z_x * z_x + z_y * z_y
    comps.append(jnp.where(r2 > 1.0, _LOG_EPS, _LOG_INVPI_EPS) + jnp.log(w_last))

    # logsumexp over the K+1 components (pure elementwise per sample)
    m = comps[0]
    for c in comps[1:]:
        m = jnp.maximum(m, c)
    s = jnp.exp(comps[0] - m)
    for c in comps[1:]:
        s = s + jnp.exp(c - m)
    out_ref[2, :, :] = m + jnp.log(s)


def _round_up(x, m):
    return (x + m - 1) // m * m


def gmm_weighted_cond_forward(loc, log_scale, weights, rdn, eps, wo_u, *,
                              lanes=512, max_tile_rows=64, interpret=False):
    """Mixture forward given learn_prior outputs and the random draws.

    loc, log_scale: (N, K, 2); weights: (N, K+1); rdn: (N,); eps: (N, 2); wo_u: (N, 2).
    Returns (z: (N, 2), log_p: (N,)).
    """
    n, k_modes, dim = loc.shape
    assert dim == 2, "GMMWeightedCondLarge mixes with a 2-D Lambertian lobe"
    assert weights.shape == (n, k_modes + 1)
    f32 = jnp.float32

    # One packed buffer: single concat + single transpose + single pad (vs. 6 of each).
    packed = jnp.concatenate(
        [loc.reshape(n, 2 * k_modes).astype(f32),
         log_scale.reshape(n, 2 * k_modes).astype(f32),
         weights.astype(f32),
         rdn.reshape(n, 1).astype(f32),
         eps.astype(f32),
         wo_u.astype(f32)], axis=1)                         # (N, F)
    num_feat = 5 * k_modes + 6
    assert packed.shape == (n, num_feat)

    # Fold the sample axis onto (rows, lanes): sublane AND lane dense.
    rows = -(-n // lanes)
    rows_pad = _round_up(rows, 8)
    tile_rows = min(max_tile_rows, rows_pad)
    if tile_rows == rows_pad and rows_pad >= 16:
        # keep at least 2 grid steps so v7x can split the "parallel" axis over its 2 TCs
        tile_rows = _round_up(rows_pad // 2, 8)
    n_pad = rows_pad * lanes
    grid = (pl.cdiv(rows_pad, tile_rows),)

    packed_t = packed.T                                     # (F, N) -- the only transpose
    if n_pad != n:
        packed_t = jnp.pad(packed_t, ((0, 0), (0, n_pad - n)))
    packed_3d = packed_t.reshape(num_feat, rows_pad, lanes)

    kernel = functools.partial(_gmm_weighted_cond_kernel, n_modes=k_modes)

    out = pl.pallas_call(
        kernel,
        out_shape=jax.ShapeDtypeStruct((3, rows_pad, lanes), f32),
        grid=grid,
        in_specs=[pl.BlockSpec((num_feat, tile_rows, lanes), lambda i: (0, i, 0))],
        out_specs=pl.BlockSpec((3, tile_rows, lanes), lambda i: (0, i, 0)),
        compiler_params=pltpu.CompilerParams(
            dimension_semantics=("parallel",)),
        interpret=interpret,
    )(packed_3d)

    flat = out.reshape(3, n_pad)[:, :n]
    z = flat[:2].T            # (N, 2)
    log_p = flat[2]           # (N,)
    return z, log_p


# ------------------------- prior network (learn_prior) -------------------------
# TODO(synk): the external `mlp.MLP` definition is not provided; assumed to be a
# Linear+ReLU stack (last layer linear). It runs as plain XLA dense layers, not Pallas.
def init_mlp_params(key, layer_sizes):
    params = []
    keys = jax.random.split(key, len(layer_sizes) - 1)
    for kk, (fan_in, fan_out) in zip(keys, zip(layer_sizes[:-1], layer_sizes[1:])):
        w = jax.random.normal(kk, (fan_in, fan_out), jnp.float32) / np.sqrt(fan_in)
        b = jnp.zeros((fan_out,), jnp.float32)
        params.append((w, b))
    return params


def mlp_forward(params, x):
    h = x
    for i, (w, b) in enumerate(params):
        h = h @ w + b
        if i < len(params) - 1:
            h = jax.nn.relu(h)
    return h


def learn_prior(params, cond_vec, n_modes, dim):
    h = mlp_forward(params, cond_vec)
    loc = h[:, :n_modes * dim].reshape(-1, n_modes, dim)
    log_scale = h[:, n_modes * dim:n_modes * dim * 2].reshape(-1, n_modes, dim)
    w = jnp.abs(h[:, n_modes * dim * 2:])
    w = w / jnp.sum(w, axis=1, keepdims=True)
    return loc, log_scale, w


# --------------------------- pure-JAX reference check ---------------------------
def reference_forward(loc, log_scale, weights, rdn, eps, wo_u):
    """Pure-JAX replica of GMMWeightedCondLarge.forward (randseed=None path)."""
    n, k, d = loc.shape
    w_last = weights[:, -1]
    lmask = rdn < w_last

    wo = wo_u * 2.0 - 1.0
    wox, woy = wo[:, 0], wo[:, 1]
    nonzero = (wox != 0.0) | (woy != 0.0)
    cond1 = (jnp.abs(wox) > jnp.abs(woy)) & nonzero
    swx = jnp.where(wox == 0.0, 1.0, wox)
    swy = jnp.where(woy == 0.0, 1.0, woy)
    theta = jnp.where(cond1, PI_over_4 * woy / swx, PI_over_2 - PI_over_4 * wox / swy)
    r = jnp.where(cond1, wox, woy)
    zl = jnp.stack([jnp.where(nonzero, r * jnp.cos(theta), 0.0),
                    jnp.where(nonzero, r * jnp.sin(theta), 0.0)], axis=-1)

    zg = eps * jnp.sum(jnp.exp(log_scale), axis=1) + jnp.sum(loc, axis=1)
    z = jnp.where(lmask[:, None], zl, zg)

    e = (z[:, None, :] - loc) / jnp.exp(log_scale)
    comp = (-0.5 * d * np.log(2.0 * np.pi) + jnp.log(weights[:, :k] + 1e-5)
            - 0.5 * jnp.sum(e * e, axis=2) - jnp.sum(log_scale, axis=2))
    r2 = jnp.sum(z * z, axis=1)
    prob_l = jnp.where(r2 > 1.0, 0.0, INV_PI)
    comp_l = jnp.log(prob_l + 1e-5) + jnp.log(w_last)
    allc = jnp.concatenate([comp, comp_l[:, None]], axis=1)
    log_p = jax.scipy.special.logsumexp(allc, axis=1)
    return z, log_p


if __name__ == "__main__":
    # Module config: n_modes=4, dim=2, cond_C=32; num_samples == batch of cond vectors.
    n_modes, dim, cond_c = 4, 2, 32
    num_samples = 8

    key = jax.random.PRNGKey(0)
    k_mlp, k_cond, k_rdn, k_eps, k_wo = jax.random.split(key, 5)

    num_out = n_modes * dim * 2 + n_modes + 1
    params = init_mlp_params(k_mlp, [cond_c, 128, 512, 128, 32, num_out])
    cond_vec = jax.random.normal(k_cond, (num_samples, cond_c), jnp.float32)

    # learn_prior: MLP + weight abs/normalize (plain XLA).
    loc, log_scale, weights = learn_prior(params, cond_vec, n_modes, dim)

    # Random draws the torch forward would make internally (randseed=None path).
    rdn = jax.random.uniform(k_rdn, (num_samples,), jnp.float32)      # branch selector
    eps = jax.random.normal(k_eps, (num_samples, dim), jnp.float32)   # Gaussian eps
    wo_u = jax.random.uniform(k_wo, (num_samples, 2), jnp.float32)    # Lambert randoms

    z, log_p = gmm_weighted_cond_forward(loc, log_scale, weights, rdn, eps, wo_u)
    jax.block_until_ready((z, log_p))

    z_ref, log_p_ref = reference_forward(loc, log_scale, weights, rdn, eps, wo_u)
    assert jnp.allclose(z, z_ref, atol=1e-5, rtol=1e-5)
    assert jnp.allclose(log_p, log_p_ref, atol=1e-4, rtol=1e-4)

    print("KERNEL_OK")
</pallas_src>

<mosaic_0001>
module attributes {stable_mosaic.version = 11 : i64} {
  func.func @_gmm_weighted_cond_kernel(%arg0: i32, %arg1: memref<26x8x512xf32, #tpu.memory_space<vmem>>, %arg2: memref<3x8x512xf32, #tpu.memory_space<vmem>>) attributes {dimension_semantics = [#tpu.dimension_semantics<parallel>], iteration_bounds = array<i64: 1>, scalar_prefetch = 0 : i64, scratch_operands = 0 : i64, tpu.core_type = #tpu.core_type<tc>, window_params = [{transform_indices = @transform_0, window_bounds = array<i64: 26, 8, 512>}, {transform_indices = @transform_1, window_bounds = array<i64: 3, 8, 512>}]} {
    %c20 = arith.constant 20 : index
    %c0 = arith.constant 0 : index
    %c0_0 = arith.constant 0 : index
    %0 = vector.load %arg1[%c20, %c0, %c0_0] : memref<26x8x512xf32, #tpu.memory_space<vmem>>, vector<1x8x512xf32>
    %1 = vector.shape_cast %0 : vector<1x8x512xf32> to vector<8x512xf32>
    %c21 = arith.constant 21 : index
    %c0_1 = arith.constant 0 : index
    %c0_2 = arith.constant 0 : index
    %2 = vector.load %arg1[%c21, %c0_1, %c0_2] : memref<26x8x512xf32, #tpu.memory_space<vmem>>, vector<1x8x512xf32>
    %3 = vector.shape_cast %2 : vector<1x8x512xf32> to vector<8x512xf32>
    %4 = arith.cmpf olt, %3, %1 : vector<8x512xf32>
    %c24 = arith.constant 24 : index
    %c0_3 = arith.constant 0 : index
    %c0_4 = arith.constant 0 : index
    %5 = vector.load %arg1[%c24, %c0_3, %c0_4] : memref<26x8x512xf32, #tpu.memory_space<vmem>>, vector<1x8x512xf32>
    %6 = vector.shape_cast %5 : vector<1x8x512xf32> to vector<8x512xf32>
    %cst = arith.constant 2.000000e+00 : f32
    %7 = vector.broadcast %cst : f32 to vector<8x512xf32>
    %8 = arith.mulf %6, %7 : vector<8x512xf32>
    %cst_5 = arith.constant 1.000000e+00 : f32
    %9 = vector.broadcast %cst_5 : f32 to vector<8x512xf32>
    %10 = arith.subf %8, %9 : vector<8x512xf32>
    %c25 = arith.constant 25 : index
    %c0_6 = arith.constant 0 : index
    %c0_7 = arith.constant 0 : index
    %11 = vector.load %arg1[%c25, %c0_6, %c0_7] : memref<26x8x512xf32, #tpu.memory_space<vmem>>, vector<1x8x512xf32>
    %12 = vector.shape_cast %11 : vector<1x8x512xf32> to vector<8x512xf32>
    %cst_8 = arith.constant 2.000000e+00 : f32
    %13 = vector.broadcast %cst_8 : f32 to vector<8x512xf32>
    %14 = arith.mulf %12, %13 : vector<8x512xf32>
    %cst_9 = arith.constant 1.000000e+00 : f32
    %15 = vector.broadcast %cst_9 : f32 to vector<8x512xf32>
    %16 = arith.subf %14, %15 : vector<8x512xf32>
    %cst_10 = arith.constant 0.000000e+00 : f32
    %17 = vector.broadcast %cst_10 : f32 to vector<8x512xf32>
    %18 = arith.cmpf one, %10, %17 : vector<8x512xf32>
    %cst_11 = arith.constant 0.000000e+00 : f32
    %19 = vector.broadcast %cst_11 : f32 to vector<8x512xf32>
    %20 = arith.cmpf one, %16, %19 : vector<8x512xf32>
    %21 = arith.ori %18, %20 : vector<8x512xi1>
    %22 = math.absf %10 : vector<8x512xf32>
    %23 = math.absf %16 : vector<8x512xf32>
    %24 = arith.cmpf ogt, %22, %23 : vector<8x512xf32>
    %25 = arith.andi %24, %21 : vector<8x512xi1>
    %cst_12 = arith.constant 0.000000e+00 : f32
    %26 = vector.broadcast %cst_12 : f32 to vector<8x512xf32>
    %27 = arith.cmpf oeq, %10, %26 : vector<8x512xf32>
    %cst_13 = arith.constant 1.000000e+00 : f32
    %28 = vector.broadcast %cst_13 : f32 to vector<8x512xf32>
    %29 = arith.select %27, %28, %10 : vector<8x512xi1>, vector<8x512xf32>
    %cst_14 = arith.constant 0.000000e+00 : f32
    %30 = vector.broadcast %cst_14 : f32 to vector<8x512xf32>
    %31 = arith.cmpf oeq, %16, %30 : vector<8x512xf32>
    %cst_15 = arith.constant 1.000000e+00 : f32
    %32 = vector.broadcast %cst_15 : f32 to vector<8x512xf32>
    %33 = arith.select %31, %32, %16 : vector<8x512xi1>, vector<8x512xf32>
    %cst_16 = arith.constant 0.785398185 : f32
    %34 = vector.broadcast %cst_16 : f32 to vector<8x512xf32>
    %35 = arith.mulf %34, %16 : vector<8x512xf32>
    %36 = arith.divf %35, %29 : vector<8x512xf32>
    %cst_17 = arith.constant 0.785398185 : f32
    %37 = vector.broadcast %cst_17 : f32 to vector<8x512xf32>
    %38 = arith.mulf %37, %10 : vector<8x512xf32>
    %39 = arith.divf %38, %33 : vector<8x512xf32>
    %cst_18 = arith.constant 1.57079637 : f32
    %40 = vector.broadcast %cst_18 : f32 to vector<8x512xf32>
    %41 = arith.subf %40, %39 : vector<8x512xf32>
    %42 = arith.select %25, %36, %41 : vector<8x512xi1>, vector<8x512xf32>
    %43 = arith.select %25, %10, %16 : vector<8x512xi1>, vector<8x512xf32>
    %44 = math.cos %42 : vector<8x512xf32>
    %45 = arith.mulf %43, %44 : vector<8x512xf32>
    %cst_19 = arith.constant 0.000000e+00 : f32
    %46 = vector.broadcast %cst_19 : f32 to vector<8x512xf32>
    %47 = arith.select %21, %45, %46 : vector<8x512xi1>, vector<8x512xf32>
    %48 = math.sin %42 : vector<8x512xf32>
    %49 = arith.mulf %43, %48 : vector<8x512xf32>
    %cst_20 = arith.constant 0.000000e+00 : f32
    %50 = vector.broadcast %cst_20 : f32 to vector<8x512xf32>
    %51 = arith.select %21, %49, %50 : vector<8x512xi1>, vector<8x512xf32>
    %c0_21 = arith.constant 0 : index
    %c0_22 = arith.constant 0 : index
    %c0_23 = arith.constant 0 : index
    %52 = vector.load %arg1[%c0_21, %c0_22, %c0_23] : memref<26x8x512xf32, #tpu.memory_space<vmem>>, vector<1x8x512xf32>
    %53 = vector.shape_cast %52 : vector<1x8x512xf32> to vector<8x512xf32>
    %c1 = arith.constant 1 : index
    %c0_24 = arith.constant 0 : index
    %c0_25 = arith.constant 0 : index
    %54 = vector.load %arg1[%c1, %c0_24, %c0_25] : memref<26x8x512xf32, #tpu.memory_space<vmem>>, vector<1x8x512xf32>
    %55 = vector.shape_cast %54 : vector<1x8x512xf32> to vector<8x512xf32>
    %c2 = arith.constant 2 : index
    %c0_26 = arith.constant 0 : index
    %c0_27 = arith.constant 0 : index
    %56 = vector.load %arg1[%c2, %c0_26, %c0_27] : memref<26x8x512xf32, #tpu.memory_space<vmem>>, vector<1x8x512xf32>
    %57 = vector.shape_cast %56 : vector<1x8x512xf32> to vector<8x512xf32>
    %c3 = arith.constant 3 : index
    %c0_28 = arith.constant 0 : index
    %c0_29 = arith.constant 0 : index
    %58 = vector.load %arg1[%c3, %c0_28, %c0_29] : memref<26x8x512xf32, #tpu.memory_space<vmem>>, vector<1x8x512xf32>
    %59 = vector.shape_cast %58 : vector<1x8x512xf32> to vector<8x512xf32>
    %c4 = arith.constant 4 : index
    %c0_30 = arith.constant 0 : index
    %c0_31 = arith.constant 0 : index
    %60 = vector.load %arg1[%c4, %c0_30, %c0_31] : memref<26x8x512xf32, #tpu.memory_space<vmem>>, vector<1x8x512xf32>
    %61 = vector.shape_cast %60 : vector<1x8x512xf32> to vector<8x512xf32>
    %c5 = arith.constant 5 : index
    %c0_32 = arith.constant 0 : index
    %c0_33 = arith.constant 0 : index
    %62 = vector.load %arg1[%c5, %c0_32, %c0_33] : memref<26x8x512xf32, #tpu.memory_space<vmem>>, vector<1x8x512xf32>
    %63 = vector.shape_cast %62 : vector<1x8x512xf32> to vector<8x512xf32>
    %c6 = arith.constant 6 : index
    %c0_34 = arith.constant 0 : index
    %c0_35 = arith.constant 0 : index
    %64 = vector.load %arg1[%c6, %c0_34, %c0_35] : memref<26x8x512xf32, #tpu.memory_space<vmem>>, vector<1x8x512xf32>
    %65 = vector.shape_cast %64 : vector<1x8x512xf32> to vector<8x512xf32>
    %c7 = arith.constant 7 : index
    %c0_36 = arith.constant 0 : index
    %c0_37 = arith.constant 0 : index
    %66 = vector.load %arg1[%c7, %c0_36, %c0_37] : memref<26x8x512xf32, #tpu.memory_space<vmem>>, vector<1x8x512xf32>
    %67 = vector.shape_cast %66 : vector<1x8x512xf32> to vector<8x512xf32>
    %c8 = arith.constant 8 : index
    %c0_38 = arith.constant 0 : index
    %c0_39 = arith.constant 0 : index
    %68 = vector.load %arg1[%c8, %c0_38, %c0_39] : memref<26x8x512xf32, #tpu.memory_space<vmem>>, vector<1x8x512xf32>
    %69 = vector.shape_cast %68 : vector<1x8x512xf32> to vector<8x512xf32>
    %c9 = arith.constant 9 : index
    %c0_40 = arith.constant 0 : index
    %c0_41 = arith.constant 0 : index
    %70 = vector.load %arg1[%c9, %c0_40, %c0_41] : memref<26x8x512xf32, #tpu.memory_space<vmem>>, vector<1x8x512xf32>
    %71 = vector.shape_cast %70 : vector<1x8x512xf32> to vector<8x512xf32>
    %c10 = arith.constant 10 : index
    %c0_42 = arith.constant 0 : index
    %c0_43 = arith.constant 0 : index
    %72 = vector.load %arg1[%c10, %c0_42, %c0_43] : memref<26x8x512xf32, #tpu.memory_space<vmem>>, vector<1x8x512xf32>
    %73 = vector.shape_cast %72 : vector<1x8x512xf32> to vector<8x512xf32>
    %c11 = arith.constant 11 : index
    %c0_44 = arith.constant 0 : index
    %c0_45 = arith.constant 0 : index
    %74 = vector.load %arg1[%c11, %c0_44, %c0_45] : memref<26x8x512xf32, #tpu.memory_space<vmem>>, vector<1x8x512xf32>
    %75 = vector.shape_cast %74 : vector<1x8x512xf32> to vector<8x512xf32>
    %c12 = arith.constant 12 : index
    %c0_46 = arith.constant 0 : index
    %c0_47 = arith.constant 0 : index
    %76 = vector.load %arg1[%c12, %c0_46, %c0_47] : memref<26x8x512xf32, #tpu.memory_space<vmem>>, vector<1x8x512xf32>
    %77 = vector.shape_cast %76 : vector<1x8x512xf32> to vector<8x512xf32>
    %c13 = arith.constant 13 : index
    %c0_48 = arith.constant 0 : index
    %c0_49 = arith.constant 0 : index
    %78 = vector.load %arg1[%c13, %c0_48, %c0_49] : memref<26x8x512xf32, #tpu.memory_space<vmem>>, vector<1x8x512xf32>
    %79 = vector.shape_cast %78 : vector<1x8x512xf32> to vector<8x512xf32>
    %c14 = arith.constant 14 : index
    %c0_50 = arith.constant 0 : index
    %c0_51 = arith.constant 0 : index
    %80 = vector.load %arg1[%c14, %c0_50, %c0_51] : memref<26x8x512xf32, #tpu.memory_space<vmem>>, vector<1x8x512xf32>
    %81 = vector.shape_cast %80 : vector<1x8x512xf32> to vector<8x512xf32>
    %c15 = arith.constant 15 : index
    %c0_52 = arith.constant 0 : index
    %c0_53 = arith.constant 0 : index
    %82 = vector.load %arg1[%c15, %c0_52, %c0_53] : memref<26x8x512xf32, #tpu.memory_space<vmem>>, vector<1x8x512xf32>
    %83 = vector.shape_cast %82 : vector<1x8x512xf32> to vector<8x512xf32>
    %84 = math.exp %69 : vector<8x512xf32>
    %85 = math.exp %71 : vector<8x512xf32>
    %86 = math.exp %73 : vector<8x512xf32>
    %87 = math.exp %75 : vector<8x512xf32>
    %88 = math.exp %77 : vector<8x512xf32>
    %89 = math.exp %79 : vector<8x512xf32>
    %90 = math.exp %81 : vector<8x512xf32>
    %91 = math.exp %83 : vector<8x512xf32>
    %cst_54 = arith.constant -2.000000e+00 : f32
    %92 = vector.broadcast %cst_54 : f32 to vector<8x512xf32>
    %93 = arith.mulf %92, %69 : vector<8x512xf32>
    %94 = math.exp %93 : vector<8x512xf32>
    %cst_55 = arith.constant -2.000000e+00 : f32
    %95 = vector.broadcast %cst_55 : f32 to vector<8x512xf32>
    %96 = arith.mulf %95, %71 : vector<8x512xf32>
    %97 = math.exp %96 : vector<8x512xf32>
    %cst_56 = arith.constant -2.000000e+00 : f32
    %98 = vector.broadcast %cst_56 : f32 to vector<8x512xf32>
    %99 = arith.mulf %98, %73 : vector<8x512xf32>
    %100 = math.exp %99 : vector<8x512xf32>
    %cst_57 = arith.constant -2.000000e+00 : f32
    %101 = vector.broadcast %cst_57 : f32 to vector<8x512xf32>
    %102 = arith.mulf %101, %75 : vector<8x512xf32>
    %103 = math.exp %102 : vector<8x512xf32>
    %cst_58 = arith.constant -2.000000e+00 : f32
    %104 = vector.broadcast %cst_58 : f32 to vector<8x512xf32>
    %105 = arith.mulf %104, %77 : vector<8x512xf32>
    %106 = math.exp %105 : vector<8x512xf32>
    %cst_59 = arith.constant -2.000000e+00 : f32
    %107 = vector.broadcast %cst_59 : f32 to vector<8x512xf32>
    %108 = arith.mulf %107, %79 : vector<8x512xf32>
    %109 = math.exp %108 : vector<8x512xf32>
    %cst_60 = arith.constant -2.000000e+00 : f32
    %110 = vector.broadcast %cst_60 : f32 to vector<8x512xf32>
    %111 = arith.mulf %110, %81 : vector<8x512xf32>
    %112 = math.exp %111 : vector<8x512xf32>
    %cst_61 = arith.constant -2.000000e+00 : f32
    %113 = vector.broadcast %cst_61 : f32 to vector<8x512xf32>
    %114 = arith.mulf %113, %83 : vector<8x512xf32>
    %115 = math.exp %114 : vector<8x512xf32>
    %116 = arith.addf %84, %86 : vector<8x512xf32>
    %117 = arith.addf %85, %87 : vector<8x512xf32>
    %118 = arith.addf %53, %57 : vector<8x512xf32>
    %119 = arith.addf %55, %59 : vector<8x512xf32>
    %120 = arith.addf %116, %88 : vector<8x512xf32>
    %121 = arith.addf %117, %89 : vector<8x512xf32>
    %122 = arith.addf %118, %61 : vector<8x512xf32>
    %123 = arith.addf %119, %63 : vector<8x512xf32>
    %124 = arith.addf %120, %90 : vector<8x512xf32>
    %125 = arith.addf %121, %91 : vector<8x512xf32>
    %126 = arith.addf %122, %65 : vector<8x512xf32>
    %127 = arith.addf %123, %67 : vector<8x512xf32>
    %c22 = arith.constant 22 : index
    %c0_62 = arith.constant 0 : index
    %c0_63 = arith.constant 0 : index
    %128 = vector.load %arg1[%c22, %c0_62, %c0_63] : memref<26x8x512xf32, #tpu.memory_space<vmem>>, vector<1x8x512xf32>
    %129 = vector.shape_cast %128 : vector<1x8x512xf32> to vector<8x512xf32>
    %130 = arith.mulf %129, %124 : vector<8x512xf32>
    %131 = arith.addf %130, %126 : vector<8x512xf32>
    %c23 = arith.constant 23 : index
    %c0_64 = arith.constant 0 : index
    %c0_65 = arith.constant 0 : index
    %132 = vector.load %arg1[%c23, %c0_64, %c0_65] : memref<26x8x512xf32, #tpu.memory_space<vmem>>, vector<1x8x512xf32>
    %133 = vector.shape_cast %132 : vector<1x8x512xf32> to vector<8x512xf32>
    %134 = arith.mulf %133, %125 : vector<8x512xf32>
    %135 = arith.addf %134, %127 : vector<8x512xf32>
    %136 = arith.select %4, %47, %131 : vector<8x512xi1>, vector<8x512xf32>
    %137 = arith.select %4, %51, %135 : vector<8x512xi1>, vector<8x512xf32>
    %c0_66 = arith.constant 0 : index
    %c0_67 = arith.constant 0 : index
    %c0_68 = arith.constant 0 : index
    %138 = vector.load %arg2[%c0_66, %c0_67, %c0_68] : memref<3x8x512xf32, #tpu.memory_space<vmem>>, vector<1x8x512xf32>
    %139 = vector.shape_cast %138 : vector<1x8x512xf32> to vector<8x512xf32>
    %140 = vector.shape_cast %136 : vector<8x512xf32> to vector<1x8x512xf32>
    tpu.vector_store %arg2[%c0_66, %c0_67, %c0_68], %140 {strides = array<i32>} : memref<3x8x512xf32, #tpu.memory_space<vmem>>, vector<1x8x512xf32>,
    %c1_69 = arith.constant 1 : index
    %c0_70 = arith.constant 0 : index
    %c0_71 = arith.constant 0 : index
    %141 = vector.load %arg2[%c1_69, %c0_70, %c0_71] : memref<3x8x512xf32, #tpu.memory_space<vmem>>, vector<1x8x512xf32>
    %142 = vector.shape_cast %141 : vector<1x8x512xf32> to vector<8x512xf32>
    %143 = vector.shape_cast %137 : vector<8x512xf32> to vector<1x8x512xf32>
    tpu.vector_store %arg2[%c1_69, %c0_70, %c0_71], %143 {strides = array<i32>} : memref<3x8x512xf32, #tpu.memory_space<vmem>>, vector<1x8x512xf32>,
    %144 = arith.subf %136, %53 : vector<8x512xf32>
    %145 = arith.subf %137, %55 : vector<8x512xf32>
    %146 = arith.mulf %144, %144 : vector<8x512xf32>
    %147 = arith.mulf %146, %94 : vector<8x512xf32>
    %148 = arith.mulf %145, %145 : vector<8x512xf32>
    %149 = arith.mulf %148, %97 : vector<8x512xf32>
    %150 = arith.addf %147, %149 : vector<8x512xf32>
    %151 = arith.addf %69, %71 : vector<8x512xf32>
    %c16 = arith.constant 16 : index
    %c0_72 = arith.constant 0 : index
    %c0_73 = arith.constant 0 : index
    %152 = vector.load %arg1[%c16, %c0_72, %c0_73] : memref<26x8x512xf32, #tpu.memory_space<vmem>>, vector<1x8x512xf32>
    %153 = vector.shape_cast %152 : vector<1x8x512xf32> to vector<8x512xf32>
    %cst_74 = arith.constant 9.99999974E-6 : f32
    %154 = vector.broadcast %cst_74 : f32 to vector<8x512xf32>
    %155 = arith.addf %153, %154 : vector<8x512xf32>
    %156 = math.log %155 : vector<8x512xf32>
    %cst_75 = arith.constant -1.83787704 : f32
    %157 = vector.broadcast %cst_75 : f32 to vector<8x512xf32>
    %158 = arith.addf %157, %156 : vector<8x512xf32>
    %cst_76 = arith.constant 5.000000e-01 : f32
    %159 = vector.broadcast %cst_76 : f32 to vector<8x512xf32>
    %160 = arith.mulf %159, %150 : vector<8x512xf32>
    %161 = arith.subf %158, %160 : vector<8x512xf32>
    %162 = arith.subf %161, %151 : vector<8x512xf32>
    %163 = arith.subf %136, %57 : vector<8x512xf32>
    %164 = arith.subf %137, %59 : vector<8x512xf32>
    %165 = arith.mulf %163, %163 : vector<8x512xf32>
    %166 = arith.mulf %165, %100 : vector<8x512xf32>
    %167 = arith.mulf %164, %164 : vector<8x512xf32>
    %168 = arith.mulf %167, %103 : vector<8x512xf32>
    %169 = arith.addf %166, %168 : vector<8x512xf32>
    %170 = arith.addf %73, %75 : vector<8x512xf32>
    %c17 = arith.constant 17 : index
    %c0_77 = arith.constant 0 : index
    %c0_78 = arith.constant 0 : index
    %171 = vector.load %arg1[%c17, %c0_77, %c0_78] : memref<26x8x512xf32, #tpu.memory_space<vmem>>, vector<1x8x512xf32>
    %172 = vector.shape_cast %171 : vector<1x8x512xf32> to vector<8x512xf32>
    %cst_79 = arith.constant 9.99999974E-6 : f32
    %173 = vector.broadcast %cst_79 : f32 to vector<8x512xf32>
    %174 = arith.addf %172, %173 : vector<8x512xf32>
    %175 = math.log %174 : vector<8x512xf32>
    %cst_80 = arith.constant -1.83787704 : f32
    %176 = vector.broadcast %cst_80 : f32 to vector<8x512xf32>
    %177 = arith.addf %176, %175 : vector<8x512xf32>
    %cst_81 = arith.constant 5.000000e-01 : f32
    %178 = vector.broadcast %cst_81 : f32 to vector<8x512xf32>
    %179 = arith.mulf %178, %169 : vector<8x512xf32>
    %180 = arith.subf %177, %179 : vector<8x512xf32>
    %181 = arith.subf %180, %170 : vector<8x512xf32>
    %182 = arith.subf %136, %61 : vector<8x512xf32>
    %183 = arith.subf %137, %63 : vector<8x512xf32>
    %184 = arith.mulf %182, %182 : vector<8x512xf32>
    %185 = arith.mulf %184, %106 : vector<8x512xf32>
    %186 = arith.mulf %183, %183 : vector<8x512xf32>
    %187 = arith.mulf %186, %109 : vector<8x512xf32>
    %188 = arith.addf %185, %187 : vector<8x512xf32>
    %189 = arith.addf %77, %79 : vector<8x512xf32>
    %c18 = arith.constant 18 : index
    %c0_82 = arith.constant 0 : index
    %c0_83 = arith.constant 0 : index
    %190 = vector.load %arg1[%c18, %c0_82, %c0_83] : memref<26x8x512xf32, #tpu.memory_space<vmem>>, vector<1x8x512xf32>
    %191 = vector.shape_cast %190 : vector<1x8x512xf32> to vector<8x512xf32>
    %cst_84 = arith.constant 9.99999974E-6 : f32
    %192 = vector.broadcast %cst_84 : f32 to vector<8x512xf32>
    %193 = arith.addf %191, %192 : vector<8x512xf32>
    %194 = math.log %193 : vector<8x512xf32>
    %cst_85 = arith.constant -1.83787704 : f32
    %195 = vector.broadcast %cst_85 : f32 to vector<8x512xf32>
    %196 = arith.addf %195, %194 : vector<8x512xf32>
    %cst_86 = arith.constant 5.000000e-01 : f32
    %197 = vector.broadcast %cst_86 : f32 to vector<8x512xf32>
    %198 = arith.mulf %197, %188 : vector<8x512xf32>
    %199 = arith.subf %196, %198 : vector<8x512xf32>
    %200 = arith.subf %199, %189 : vector<8x512xf32>
    %201 = arith.subf %136, %65 : vector<8x512xf32>
    %202 = arith.subf %137, %67 : vector<8x512xf32>
    %203 = arith.mulf %201, %201 : vector<8x512xf32>
    %204 = arith.mulf %203, %112 : vector<8x512xf32>
    %205 = arith.mulf %202, %202 : vector<8x512xf32>
    %206 = arith.mulf %205, %115 : vector<8x512xf32>
    %207 = arith.addf %204, %206 : vector<8x512xf32>
    %208 = arith.addf %81, %83 : vector<8x512xf32>
    %c19 = arith.constant 19 : index
    %c0_87 = arith.constant 0 : index
    %c0_88 = arith.constant 0 : index
    %209 = vector.load %arg1[%c19, %c0_87, %c0_88] : memref<26x8x512xf32, #tpu.memory_space<vmem>>, vector<1x8x512xf32>
    %210 = vector.shape_cast %209 : vector<1x8x512xf32> to vector<8x512xf32>
    %cst_89 = arith.constant 9.99999974E-6 : f32
    %211 = vector.broadcast %cst_89 : f32 to vector<8x512xf32>
    %212 = arith.addf %210, %211 : vector<8x512xf32>
    %213 = math.log %212 : vector<8x512xf32>
    %cst_90 = arith.constant -1.83787704 : f32
    %214 = vector.broadcast %cst_90 : f32 to vector<8x512xf32>
    %215 = arith.addf %214, %213 : vector<8x512xf32>
    %cst_91 = arith.constant 5.000000e-01 : f32
    %216 = vector.broadcast %cst_91 : f32 to vector<8x512xf32>
    %217 = arith.mulf %216, %207 : vector<8x512xf32>
    %218 = arith.subf %215, %217 : vector<8x512xf32>
    %219 = arith.subf %218, %208 : vector<8x512xf32>
    %220 = arith.mulf %136, %136 : vector<8x512xf32>
    %221 = arith.mulf %137, %137 : vector<8x512xf32>
    %222 = arith.addf %220, %221 : vector<8x512xf32>
    %cst_92 = arith.constant 1.000000e+00 : f32
    %223 = vector.broadcast %cst_92 : f32 to vector<8x512xf32>
    %224 = arith.cmpf ogt, %222, %223 : vector<8x512xf32>
    %cst_93 = arith.constant -11.5129251 : f32
    %cst_94 = arith.constant -1.1446985 : f32
    %225 = vector.broadcast %cst_93 : f32 to vector<8x512xf32>
    %226 = vector.broadcast %cst_94 : f32 to vector<8x512xf32>
    %227 = arith.select %224, %225, %226 : vector<8x512xi1>, vector<8x512xf32>
    %228 = math.log %1 : vector<8x512xf32>
    %229 = arith.addf %227, %228 : vector<8x512xf32>
    %230 = arith.maximumf %162, %181 : vector<8x512xf32>
    %231 = arith.maximumf %230, %200 : vector<8x512xf32>
    %232 = arith.maximumf %231, %219 : vector<8x512xf32>
    %233 = arith.maximumf %232, %229 : vector<8x512xf32>
    %234 = arith.subf %162, %233 : vector<8x512xf32>
    %235 = math.exp %234 : vector<8x512xf32>
    %236 = arith.subf %181, %233 : vector<8x512xf32>
    %237 = math.exp %236 : vector<8x512xf32>
    %238 = arith.addf %235, %237 : vector<8x512xf32>
    %239 = arith.subf %200, %233 : vector<8x512xf32>
    %240 = math.exp %239 : vector<8x512xf32>
    %241 = arith.addf %238, %240 : vector<8x512xf32>
    %242 = arith.subf %219, %233 : vector<8x512xf32>
    %243 = math.exp %242 : vector<8x512xf32>
    %244 = arith.addf %241, %243 : vector<8x512xf32>
    %245 = arith.subf %229, %233 : vector<8x512xf32>
    %246 = math.exp %245 : vector<8x512xf32>
    %247 = arith.addf %244, %246 : vector<8x512xf32>
    %248 = math.log %247 : vector<8x512xf32>
    %249 = arith.addf %233, %248 : vector<8x512xf32>
    %c2_95 = arith.constant 2 : index
    %c0_96 = arith.constant 0 : index
    %c0_97 = arith.constant 0 : index
    %250 = vector.load %arg2[%c2_95, %c0_96, %c0_97] : memref<3x8x512xf32, #tpu.memory_space<vmem>>, vector<1x8x512xf32>
    %251 = vector.shape_cast %250 : vector<1x8x512xf32> to vector<8x512xf32>
    %252 = vector.shape_cast %249 : vector<8x512xf32> to vector<1x8x512xf32>
    tpu.vector_store %arg2[%c2_95, %c0_96, %c0_97], %252 {strides = array<i32>} : memref<3x8x512xf32, #tpu.memory_space<vmem>>, vector<1x8x512xf32>,
    return
  }
  func.func @transform_0(%arg0: i32) -> (i32, i32, i32) {
    %c0_i32 = arith.constant 0 : i32
    %c0_i32_0 = arith.constant 0 : i32
    %c0_i32_1 = arith.constant 0 : i32
    return %c0_i32, %arg0, %c0_i32_0 : i32, i32, i32
  }
  func.func @transform_1(%arg0: i32) -> (i32, i32, i32) {
    %c0_i32 = arith.constant 0 : i32
    %c0_i32_0 = arith.constant 0 : i32
    %c0_i32_1 = arith.constant 0 : i32
    return %c0_i32, %arg0, %c0_i32_0 : i32, i32, i32
  }
}

</mosaic_0001>

<llo_original>
// kernel: tpu_custom_call.1
$region0: #{tpu_custom_call.1}
  #allocation0 [shape = 'u32[]', space=smem, size = 0x4, offset = 0x4, fixed_abs, tag = 'smem constant byte address 0x4 - core index']
  #allocation1 [shape = 'u32[144,128]{1,0:T(1,128)}', space=vmem, size = 0x12000, scoped, tag = 'internal scratch']
  %s0 = inlined_call_operand.hbm [shape: f32[26,8,512], index: 0, kind: input, shape index: {}]
  %s1 = inlined_call_operand.hbm [shape: f32[3,8,512], index: 1, kind: output, shape index: {}]
  %s2 = sld [smem:[#allocation0]]
  $region18: #{tpu_custom_call.1} parent=0
    _
  %s4 = ssub.s32 1, %s2
  %s5 = scalar_select 0, %s4, %s2
  $region1: #{tpu_custom_call.1} parent=0
    #allocation2 [shape = 'u8[425984]{0}', space=vmem, size = 0x68000, scoped, tag = 'input window, operand 0, single buffered']
    #allocation3 [shape = 's32[1]{0}', space=sflag, size = 0x4, scoped, tag = 'scoped memory for tpu_custom_call.1']
    #allocation4 [shape = 's32[1]{0}', space=sflag, size = 0x4, scoped, tag = 'scoped memory for tpu_custom_call.1']
    #allocation5 [shape = 'u8[49152]{0}', space=vmem, size = 0xc000, scoped, tag = 'output window, operand 0, single buffered']
    %6 = vsyncpa [#allocation3], 0
    %7 = vsyncpa [#allocation4], 0
    // Predicated region
    $region2: #{tpu_custom_call.1} parent=1 // pred_check
      _
    $region3: #{tpu_custom_call.1} parent=1 // pred_check_branch
      %9 = sbr.rel (0) target = $region5
    $region4: #{tpu_custom_call.1} parent=1 // pred_region
      %s11 = ssub.s32 13312, 13312
      %12 = vsyncadd [#allocation3], %s11
      %s13 = sshll.u32 [#allocation2], 4
      %s14 = int_to_ptr.vmem [resolvable:$true] %s13
      %19 = dma.hbm_to_vmem [thread:$0]  %s0, 13312, %s14, [#allocation3], 512, 512, 32
    $region5: #{tpu_custom_call.1} parent=1 // pred_fallthru
      _
    // Predicated region
    $region6: #{tpu_custom_call.1} parent=1 // pred_check
      _
    $region7: #{tpu_custom_call.1} parent=1 // pred_check_branch
      %21 = sbr.rel (0) target = $region9
    $region8: #{tpu_custom_call.1} parent=1 // pred_region
      %22 = dma.done [#allocation3], 13312
    $region9: #{tpu_custom_call.1} parent=1 // pred_fallthru
      _
    %s23 = scalar_lea.vmem [#allocation2], 640
    %v24 = vld [vmem:[%s23] sm:$0xff]
    %v25 = vld [vmem:[%s23 + $0x8] sm:$0xff]
    %v26 = vld [vmem:[%s23 + $0x10] sm:$0xff]
    %v27 = vld [vmem:[%s23 + $0x18] sm:$0xff]
    %s28 = scalar_lea.vmem [#allocation2], 672
    %v29 = vld [vmem:[%s28] sm:$0xff]
    %v30 = vld [vmem:[%s28 + $0x8] sm:$0xff]
    %v31 = vld [vmem:[%s28 + $0x10] sm:$0xff]
    %v32 = vld [vmem:[%s28 + $0x18] sm:$0xff]
    %vm33 = vcmp.lt.f32.partialorder %v29, %v24
    %vm34 = vcmp.lt.f32.partialorder %v30, %v25
    %vm35 = vcmp.lt.f32.partialorder %v31, %v26
    %vm36 = vcmp.lt.f32.partialorder %v32, %v27
    %s37 = scalar_lea.vmem [#allocation2], 768
    %v38 = vld [vmem:[%s37] sm:$0xff]
    %v39 = vld [vmem:[%s37 + $0x8] sm:$0xff]
    %v40 = vld [vmem:[%s37 + $0x10] sm:$0xff]
    %v41 = vld [vmem:[%s37 + $0x18] sm:$0xff]
    %v42 = vmul.f32 %v38, 2.0
    %v43 = vmul.f32 %v39, 2.0
    %v44 = vmul.f32 %v40, 2.0
    %v45 = vmul.f32 %v41, 2.0
    %v46 = vsub.f32 %v42, 1.0
    %v47 = vsub.f32 %v43, 1.0
    %v48 = vsub.f32 %v44, 1.0
    %v49 = vsub.f32 %v45, 1.0
    %s50 = scalar_lea.vmem [#allocation2], 800
    %v51 = vld [vmem:[%s50] sm:$0xff]
    %v52 = vld [vmem:[%s50 + $0x8] sm:$0xff]
    %v53 = vld [vmem:[%s50 + $0x10] sm:$0xff]
    %v54 = vld [vmem:[%s50 + $0x18] sm:$0xff]
    %v55 = vmul.f32 %v51, 2.0
    %v56 = vmul.f32 %v52, 2.0
    %v57 = vmul.f32 %v53, 2.0
    %v58 = vmul.f32 %v54, 2.0
    %v59 = vsub.f32 %v55, 1.0
    %v60 = vsub.f32 %v56, 1.0
    %v61 = vsub.f32 %v57, 1.0
    %v62 = vsub.f32 %v58, 1.0
    %vm63 = vcmp.ne.f32.partialorder %v46, 0.0
    %vm64 = vcmp.ne.f32.partialorder %v47, 0.0
    %vm65 = vcmp.ne.f32.partialorder %v48, 0.0
    %vm66 = vcmp.ne.f32.partialorder %v49, 0.0
    %vm67 = vcmp.ne.f32.partialorder %v59, 0.0
    %vm68 = vcmp.ne.f32.partialorder %v60, 0.0
    %vm69 = vcmp.ne.f32.partialorder %v61, 0.0
    %vm70 = vcmp.ne.f32.partialorder %v62, 0.0
    %vm71 = vmor %vm63, %vm67
    %vm72 = vmor %vm64, %vm68
    %vm73 = vmor %vm65, %vm69
    %vm74 = vmor %vm66, %vm70
    %v75 = vand.u32 2147483647, %v46
    %v76 = vand.u32 2147483647, %v47
    %v77 = vand.u32 2147483647, %v48
    %v78 = vand.u32 2147483647, %v49
    %v79 = vand.u32 2147483647, %v59
    %v80 = vand.u32 2147483647, %v60
    %v81 = vand.u32 2147483647, %v61
    %v82 = vand.u32 2147483647, %v62
    %vm83 = vcmp.gt.f32.partialorder %v75, %v79
    %vm84 = vcmp.gt.f32.partialorder %v76, %v80
    %vm85 = vcmp.gt.f32.partialorder %v77, %v81
    %vm86 = vcmp.gt.f32.partialorder %v78, %v82
    %vm87 = vmand %vm83, %vm71
    %vm88 = vmand %vm84, %vm72
    %vm89 = vmand %vm85, %vm73
    %vm90 = vmand %vm86, %vm74
    %vm91 = vcmp.eq.f32.partialorder %v46, 0.0
    %vm92 = vcmp.eq.f32.partialorder %v47, 0.0
    %vm93 = vcmp.eq.f32.partialorder %v48, 0.0
    %vm94 = vcmp.eq.f32.partialorder %v49, 0.0
    %v95 = vsel %vm91, 1.0, %v46
    %v96 = vsel %vm92, 1.0, %v47
    %v97 = vsel %vm93, 1.0, %v48
    %v98 = vsel %vm94, 1.0, %v49
    %vm99 = vcmp.eq.f32.partialorder %v59, 0.0
    %vm100 = vcmp.eq.f32.partialorder %v60, 0.0
    %vm101 = vcmp.eq.f32.partialorder %v61, 0.0
    %vm102 = vcmp.eq.f32.partialorder %v62, 0.0
    %v103 = vsel %vm99, 1.0, %v59
    %v104 = vsel %vm100, 1.0, %v60
    %v105 = vsel %vm101, 1.0, %v61
    %v106 = vsel %vm102, 1.0, %v62
    %v107 = vmul.f32 %v59, 0.7853982
    %v108 = vmul.f32 %v60, 0.7853982
    %v109 = vmul.f32 %v61, 0.7853982
    %v110 = vmul.f32 %v62, 0.7853982
    %v111 = vrcp.pop %v95
    %v112 = vmul.f32 %v107, %v111
    %v113 = vrcp.pop %v96
    %v114 = vmul.f32 %v108, %v113
    %v115 = vrcp.pop %v97
    %v116 = vmul.f32 %v109, %v115
    %v117 = vrcp.pop %v98
    %v118 = vmul.f32 %v110, %v117
    %v119 = vmul.f32 %v46, 0.7853982
    %v120 = vmul.f32 %v47, 0.7853982
    %v121 = vmul.f32 %v48, 0.7853982
    %v122 = vmul.f32 %v49, 0.7853982
    %v123 = vrcp.pop %v103
    %v124 = vmul.f32 %v119, %v123
    %v125 = vrcp.pop %v104
    %v126 = vmul.f32 %v120, %v125
    %v127 = vrcp.pop %v105
    %v128 = vmul.f32 %v121, %v127
    %v129 = vrcp.pop %v106
    %v130 = vmul.f32 %v122, %v129
    %v131 = vsub.f32 1.5707964, %v124
    %v132 = vsub.f32 1.5707964, %v126
    %v133 = vsub.f32 1.5707964, %v128
    %v134 = vsub.f32 1.5707964, %v130
    %v135 = vsel %vm87, %v112, %v131
    %v136 = vsel %vm88, %v114, %v132
    %v137 = vsel %vm89, %v116, %v133
    %v138 = vsel %vm90, %v118, %v134
    %v139 = vsel %vm87, %v46, %v59
    %v140 = vsel %vm88, %v47, %v60
    %v141 = vsel %vm89, %v48, %v61
    %v142 = vsel %vm90, %v49, %v62
    %v143 = vand.u32 2147483647, %v135
    %vm144 = vcmp.le.f32.partialorder %v143, 0.7853982
    %vm145 = vcmp.lt.s32.totalorder %v135, 0
    %v146 = vand.u32 %v135, 2139095040
    %v147 = vshrl.u32 %v146, 23
    %v148 = vsub.s32 %v147, 127
    %v149 = vand.u32 2147483647, %v135
    %v150 = vand.u32 %v149, 8388607
    %v151 = vor.u32 %v150, 8388608
    %v152 = vsub.s32 0, %v151
    %v153 = vadd.s32 %v148, 1
    %vm154 = vcmp.gt.s32.totalorder %v153, 0
    %v155 = vsel %vm154, %v153, 0
    %v156 = vshrl.u32 %v155, 5
    %v157 = vand.u32 %v155, 31
    %v158 = vsub.s32 32, %v157
    %v159 = vshrl.u32 683565275, %v158
    %v160 = vshll.u32 683565275, %v157
    %v161 = vshrl.u32 2475754826, %v158
    %v162 = vor.u32 %v160, %v161
    %v163 = vshll.u32 2475754826, %v157
    %v164 = vshrl.u32 2131351028, %v158
    %v165 = vor.u32 %v163, %v164
    %v166 = vshll.u32 2131351028, %v157
    %v167 = vshrl.u32 2102212464, %v158
    %v168 = vor.u32 %v166, %v167
    %v169 = vshll.u32 2102212464, %v157
    %v170 = vshrl.u32 920167782, %v158
    %v171 = vor.u32 %v169, %v170
    %v172 = vshll.u32 920167782, %v157
    %v173 = vshrl.u32 1326507024, %v158
    %v174 = vor.u32 %v172, %v173
    %vm175 = vcmp.lt.s32.totalorder %v156, 1
    %vm176 = vcmp.lt.s32.totalorder %v156, 2
    %vm177 = vcmp.lt.s32.totalorder %v156, 3
    %vm178 = vcmp.lt.s32.totalorder %v156, 4
    %v179 = vsel %vm175, %v159, %v162
    %v180 = vsel %vm178, %v168, 2102212464
    %v181 = vsel %vm177, %v165, %v180
    %v182 = vsel %vm176, %v179, %v181
    %v183 = vsel %vm175, %v162, %v165
    %v184 = vsel %vm178, %v171, 920167782
    %v185 = vsel %vm177, %v168, %v184
    %v186 = vsel %vm176, %v183, %v185
    %v187 = vsel %vm175, %v165, %v168
    %v188 = vsel %vm178, %v174, 1326507024
    %v189 = vsel %vm177, %v171, %v188
    %v190 = vsel %vm176, %v187, %v189
    %v191 = vshll.u32 %v151, 8
    %v192 = vmul.u32.u64.compose %v191, %v190
    %v193 = vextract.low.u32 %v192
    %v194 = vextract.high.u32 %v192
    %v195 = vmul.u32.u64.compose %v191, %v186
    %v196 = vextract.low.u32 %v195
    %v197 = vextract.high.u32 %v195
    %v198 = vmul.u32 %v191, %v182
    %v199 = vadd.s32 %v194, %v196
    %vm200 = vc.u32 %v194, %v196
    %v201 = vadd.s32 %v197, 1
    %v202 = vsel %vm200, %v201, %v197
    %v203 = vadd.s32 %v198, %v202
    %v204 = vadd.s32 %v203, 536870912
    %v205 = vshrl.u32 %v204, 30
    %v206 = vshll.u32 %v205, 30
    %v207 = vsub.s32 %v203, %v206
    %vm208 = vcmp.lt.s32.totalorder %v207, 0
    %v209 = vsub.s32 0, %v207
    %v210 = vsel %vm208, %v209, %v207
    %v211 = vclz %v210
    %v212 = vsub.s32 %v211, 2
    %vm213 = vcmp.gt.s32.totalorder 0, %v212
    %v214 = vsel %vm213, 0, %v212
    %v215 = vsub.s32 32, %v214
    %v216 = vshll.u32 %v207, %v214
    %v217 = vshrl.u32 %v199, %v215
    %v218 = vor.u32 %v216, %v217
    %v219 = vsub.s32 4294967266, %v214
    %v220 = vadd.s32 %v219, 127
    %v221 = vshll.u32 %v220, 23
    %v222 = vor.u32 4788187, %v221
    %v223 = vand.u32 2147483647, %v222
    %v225 = vcvt.s32.f32 %v218
    %v226 = vmul.f32 %v225, %v223
    %v227 = vxor.u32 %v226, 2147483648
    %v228 = vsel %vm145, %v227, %v226
    %v229 = vsub.s32 4, %v205
    %v230 = vsel %vm145, %v229, %v205
    %v231 = vsel %vm144, %v135, %v228
    %v232 = vsel %vm144, 0, %v230
    %v233 = vcosq.f32.pop %v231
    %v234 = vsinq.f32.pop %v231
    %vm235 = vweird.f32 %v135
    %v236 = vand.u32 %v232, 3
    %vm237 = vcmp.lt.s32.totalorder %v236, 2
    %vm238 = vcmp.eq.s32.totalorder %v236, 0
    %v239 = vxor.u32 %v234, 2147483648
    %v240 = vsel %vm238, %v233, %v239
    %vm241 = vcmp.eq.s32.totalorder %v236, 2
    %v242 = vxor.u32 %v233, 2147483648
    %v243 = vsel %vm241, %v242, %v234
    %v244 = vsel %vm237, %v240, %v243
    %v245 = vsel %vm235, nan, %v244
    %v246 = vand.u32 2147483647, %v136
    %vm247 = vcmp.le.f32.partialorder %v246, 0.7853982
    %vm248 = vcmp.lt.s32.totalorder %v136, 0
    %v249 = vand.u32 %v136, 2139095040
    %v250 = vshrl.u32 %v249, 23
    %v251 = vsub.s32 %v250, 127
    %v252 = vand.u32 2147483647, %v136
    %v253 = vand.u32 %v252, 8388607
    %v254 = vor.u32 %v253, 8388608
    %v255 = vsub.s32 0, %v254
    %v256 = vadd.s32 %v251, 1
    %vm257 = vcmp.gt.s32.totalorder %v256, 0
    %v258 = vsel %vm257, %v256, 0
    %v259 = vshrl.u32 %v258, 5
    %v260 = vand.u32 %v258, 31
    %v261 = vsub.s32 32, %v260
    %v262 = vshrl.u32 683565275, %v261
    %v263 = vshll.u32 683565275, %v260
    %v264 = vshrl.u32 2475754826, %v261
    %v265 = vor.u32 %v263, %v264
    %v266 = vshll.u32 2475754826, %v260
    %v267 = vshrl.u32 2131351028, %v261
    %v268 = vor.u32 %v266, %v267
    %v269 = vshll.u32 2131351028, %v260
    %v270 = vshrl.u32 2102212464, %v261
    %v271 = vor.u32 %v269, %v270
    %v272 = vshll.u32 2102212464, %v260
    %v273 = vshrl.u32 920167782, %v261
    %v274 = vor.u32 %v272, %v273
    %v275 = vshll.u32 920167782, %v260
    %v276 = vshrl.u32 1326507024, %v261
    %v277 = vor.u32 %v275, %v276
    %vm278 = vcmp.lt.s32.totalorder %v259, 1
    %vm279 = vcmp.lt.s32.totalorder %v259, 2
    %vm280 = vcmp.lt.s32.totalorder %v259, 3
    %vm281 = vcmp.lt.s32.totalorder %v259, 4
    %v282 = vsel %vm278, %v262, %v265
    %v283 = vsel %vm281, %v271, 2102212464
    %v284 = vsel %vm280, %v268, %v283
    %v285 = vsel %vm279, %v282, %v284
    %v286 = vsel %vm278, %v265, %v268
    %v287 = vsel %vm281, %v274, 920167782
    %v288 = vsel %vm280, %v271, %v287
    %v289 = vsel %vm279, %v286, %v288
    %v290 = vsel %vm278, %v268, %v271
    %v291 = vsel %vm281, %v277, 1326507024
    %v292 = vsel %vm280, %v274, %v291
    %v293 = vsel %vm279, %v290, %v292
    %v294 = vshll.u32 %v254, 8
    %v295 = vmul.u32.u64.compose %v294, %v293
    %v296 = vextract.low.u32 %v295
    %v297 = vextract.high.u32 %v295
    %v298 = vmul.u32.u64.compose %v294, %v289
    %v299 = vextract.low.u32 %v298
    %v300 = vextract.high.u32 %v298
    %v301 = vmul.u32 %v294, %v285
    %v302 = vadd.s32 %v297, %v299
    %vm303 = vc.u32 %v297, %v299
    %v304 = vadd.s32 %v300, 1
    %v305 = vsel %vm303, %v304, %v300
    %v306 = vadd.s32 %v301, %v305
    %v307 = vadd.s32 %v306, 536870912
    %v308 = vshrl.u32 %v307, 30
    %v309 = vshll.u32 %v308, 30
    %v310 = vsub.s32 %v306, %v309
    %vm311 = vcmp.lt.s32.totalorder %v310, 0
    %v312 = vsub.s32 0, %v310
    %v313 = vsel %vm311, %v312, %v310
    %v314 = vclz %v313
    %v315 = vsub.s32 %v314, 2
    %vm316 = vcmp.gt.s32.totalorder 0, %v315
    %v317 = vsel %vm316, 0, %v315
    %v318 = vsub.s32 32, %v317
    %v319 = vshll.u32 %v310, %v317
    %v320 = vshrl.u32 %v302, %v318
    %v321 = vor.u32 %v319, %v320
    %v322 = vsub.s32 4294967266, %v317
    %v323 = vadd.s32 %v322, 127
    %v324 = vshll.u32 %v323, 23
    %v325 = vor.u32 4788187, %v324
    %v326 = vand.u32 2147483647, %v325
    %v328 = vcvt.s32.f32 %v321
    %v329 = vmul.f32 %v328, %v326
    %v330 = vxor.u32 %v329, 2147483648
    %v331 = vsel %vm248, %v330, %v329
    %v332 = vsub.s32 4, %v308
    %v333 = vsel %vm248, %v332, %v308
    %v334 = vsel %vm247, %v136, %v331
    %v335 = vsel %vm247, 0, %v333
    %v336 = vcosq.f32.pop %v334
    %v337 = vsinq.f32.pop %v334
    %vm338 = vweird.f32 %v136
    %v339 = vand.u32 %v335, 3
    %vm340 = vcmp.lt.s32.totalorder %v339, 2
    %vm341 = vcmp.eq.s32.totalorder %v339, 0
    %v342 = vxor.u32 %v337, 2147483648
    %v343 = vsel %vm341, %v336, %v342
    %vm344 = vcmp.eq.s32.totalorder %v339, 2
    %v345 = vxor.u32 %v336, 2147483648
    %v346 = vsel %vm344, %v345, %v337
    %v347 = vsel %vm340, %v343, %v346
    %v348 = vsel %vm338, nan, %v347
    %v349 = vand.u32 2147483647, %v137
    %vm350 = vcmp.le.f32.partialorder %v349, 0.7853982
    %vm351 = vcmp.lt.s32.totalorder %v137, 0
    %v352 = vand.u32 %v137, 2139095040
    %v353 = vshrl.u32 %v352, 23
    %v354 = vsub.s32 %v353, 127
    %v355 = vand.u32 2147483647, %v137
    %v356 = vand.u32 %v355, 8388607
    %v357 = vor.u32 %v356, 8388608
    %v358 = vsub.s32 0, %v357
    %v359 = vadd.s32 %v354, 1
    %vm360 = vcmp.gt.s32.totalorder %v359, 0
    %v361 = vsel %vm360, %v359, 0
    %v362 = vshrl.u32 %v361, 5
    %v363 = vand.u32 %v361, 31
    %v364 = vsub.s32 32, %v363
    %v365 = vshrl.u32 683565275, %v364
    %v366 = vshll.u32 683565275, %v363
    %v367 = vshrl.u32 2475754826, %v364
    %v368 = vor.u32 %v366, %v367
    %v369 = vshll.u32 2475754826, %v363
    %v370 = vshrl.u32 2131351028, %v364
    %v371 = vor.u32 %v369, %v370
    %v372 = vshll.u32 2131351028, %v363
    %v373 = vshrl.u32 2102212464, %v364
    %v374 = vor.u32 %v372, %v373
    %v375 = vshll.u32 2102212464, %v363
    %v376 = vshrl.u32 920167782, %v364
    %v377 = vor.u32 %v375, %v376
    %v378 = vshll.u32 920167782, %v363
    %v379 = vshrl.u32 1326507024, %v364
    %v380 = vor.u32 %v378, %v379
    %vm381 = vcmp.lt.s32.totalorder %v362, 1
    %vm382 = vcmp.lt.s32.totalorder %v362, 2
    %vm383 = vcmp.lt.s32.totalorder %v362, 3
    %vm384 = vcmp.lt.s32.totalorder %v362, 4
    %v385 = vsel %vm381, %v365, %v368
    %v386 = vsel %vm384, %v374, 2102212464
    %v387 = vsel %vm383, %v371, %v386
    %v388 = vsel %vm382, %v385, %v387
    %v389 = vsel %vm381, %v368, %v371
    %v390 = vsel %vm384, %v377, 920167782
    %v391 = vsel %vm383, %v374, %v390
    %v392 = vsel %vm382, %v389, %v391
    %v393 = vsel %vm381, %v371, %v374
    %v394 = vsel %vm384, %v380, 1326507024
    %v395 = vsel %vm383, %v377, %v394
    %v396 = vsel %vm382, %v393, %v395
    %v397 = vshll.u32 %v357, 8
    %v398 = vmul.u32.u64.compose %v397, %v396
    %v399 = vextract.low.u32 %v398
    %v400 = vextract.high.u32 %v398
    %v401 = vmul.u32.u64.compose %v397, %v392
    %v402 = vextract.low.u32 %v401
    %v403 = vextract.high.u32 %v401
    %v404 = vmul.u32 %v397, %v388
    %v405 = vadd.s32 %v400, %v402
    %vm406 = vc.u32 %v400, %v402
    %v407 = vadd.s32 %v403, 1
    %v408 = vsel %vm406, %v407, %v403
    %v409 = vadd.s32 %v404, %v408
    %v410 = vadd.s32 %v409, 536870912
    %v411 = vshrl.u32 %v410, 30
    %v412 = vshll.u32 %v411, 30
    %v413 = vsub.s32 %v409, %v412
    %vm414 = vcmp.lt.s32.totalorder %v413, 0
    %v415 = vsub.s32 0, %v413
    %v416 = vsel %vm414, %v415, %v413
    %v417 = vclz %v416
    %v418 = vsub.s32 %v417, 2
    %vm419 = vcmp.gt.s32.totalorder 0, %v418
    %v420 = vsel %vm419, 0, %v418
    %v421 = vsub.s32 32, %v420
    %v422 = vshll.u32 %v413, %v420
    %v423 = vshrl.u32 %v405, %v421
    %v424 = vor.u32 %v422, %v423
    %v425 = vsub.s32 4294967266, %v420
    %v426 = vadd.s32 %v425, 127
    %v427 = vshll.u32 %v426, 23
    %v428 = vor.u32 4788187, %v427
    %v429 = vand.u32 2147483647, %v428
    %v431 = vcvt.s32.f32 %v424
    %v432 = vmul.f32 %v431, %v429
    %v433 = vxor.u32 %v432, 2147483648
    %v434 = vsel %vm351, %v433, %v432
    %v435 = vsub.s32 4, %v411
    %v436 = vsel %vm351, %v435, %v411
    %v437 = vsel %vm350, %v137, %v434
    %v438 = vsel %vm350, 0, %v436
    %v439 = vcosq.f32.pop %v437
    %v440 = vsinq.f32.pop %v437
    %vm441 = vweird.f32 %v137
    %v442 = vand.u32 %v438, 3
    %vm443 = vcmp.lt.s32.totalorder %v442, 2
    %vm444 = vcmp.eq.s32.totalorder %v442, 0
    %v445 = vxor.u32 %v440, 2147483648
    %v446 = vsel %vm444, %v439, %v445
    %vm447 = vcmp.eq.s32.totalorder %v442, 2
    %v448 = vxor.u32 %v439, 2147483648
    %v449 = vsel %vm447, %v448, %v440
    %v450 = vsel %vm443, %v446, %v449
    %v451 = vsel %vm441, nan, %v450
    %v452 = vand.u32 2147483647, %v138
    %vm453 = vcmp.le.f32.partialorder %v452, 0.7853982
    %vm454 = vcmp.lt.s32.totalorder %v138, 0
    %v455 = vand.u32 %v138, 2139095040
    %v456 = vshrl.u32 %v455, 23
    %v457 = vsub.s32 %v456, 127
    %v458 = vand.u32 2147483647, %v138
    %v459 = vand.u32 %v458, 8388607
    %v460 = vor.u32 %v459, 8388608
    %v461 = vsub.s32 0, %v460
    %v462 = vadd.s32 %v457, 1
    %vm463 = vcmp.gt.s32.totalorder %v462, 0
    %v464 = vsel %vm463, %v462, 0
    %v465 = vshrl.u32 %v464, 5
    %v466 = vand.u32 %v464, 31
    %v467 = vsub.s32 32, %v466
    %v468 = vshrl.u32 683565275, %v467
    %v469 = vshll.u32 683565275, %v466
    %v470 = vshrl.u32 2475754826, %v467
    %v471 = vor.u32 %v469, %v470
    %v472 = vshll.u32 2475754826, %v466
    %v473 = vshrl.u32 2131351028, %v467
    %v474 = vor.u32 %v472, %v473
    %v475 = vshll.u32 2131351028, %v466
    %v476 = vshrl.u32 2102212464, %v467
    %v477 = vor.u32 %v475, %v476
    %v478 = vshll.u32 2102212464, %v466
    %v479 = vshrl.u32 920167782, %v467
    %v480 = vor.u32 %v478, %v479
    %v481 = vshll.u32 920167782, %v466
    %v482 = vshrl.u32 1326507024, %v467
    %v483 = vor.u32 %v481, %v482
    %vm484 = vcmp.lt.s32.totalorder %v465, 1
    %vm485 = vcmp.lt.s32.totalorder %v465, 2
    %vm486 = vcmp.lt.s32.totalorder %v465, 3
    %vm487 = vcmp.lt.s32.totalorder %v465, 4
    %v488 = vsel %vm484, %v468, %v471
    %v489 = vsel %vm487, %v477, 2102212464
    %v490 = vsel %vm486, %v474, %v489
    %v491 = vsel %vm485, %v488, %v490
    %v492 = vsel %vm484, %v471, %v474
    %v493 = vsel %vm487, %v480, 920167782
    %v494 = vsel %vm486, %v477, %v493
    %v495 = vsel %vm485, %v492, %v494
    %v496 = vsel %vm484, %v474, %v477
    %v497 = vsel %vm487, %v483, 1326507024
    %v498 = vsel %vm486, %v480, %v497
    %v499 = vsel %vm485, %v496, %v498
    %v500 = vshll.u32 %v460, 8
    %v501 = vmul.u32.u64.compose %v500, %v499
    %v502 = vextract.low.u32 %v501
    %v503 = vextract.high.u32 %v501
    %v504 = vmul.u32.u64.compose %v500, %v495
    %v505 = vextract.low.u32 %v504
    %v506 = vextract.high.u32 %v504
    %v507 = vmul.u32 %v500, %v491
    %v508 = vadd.s32 %v503, %v505
    %vm509 = vc.u32 %v503, %v505
    %v510 = vadd.s32 %v506, 1
    %v511 = vsel %vm509, %v510, %v506
    %v512 = vadd.s32 %v507, %v511
    %v513 = vadd.s32 %v512, 536870912
    %v514 = vshrl.u32 %v513, 30
    %v515 = vshll.u32 %v514, 30
    %v516 = vsub.s32 %v512, %v515
    %vm517 = vcmp.lt.s32.totalorder %v516, 0
    %v518 = vsub.s32 0, %v516
    %v519 = vsel %vm517, %v518, %v516
    %v520 = vclz %v519
    %v521 = vsub.s32 %v520, 2
    %vm522 = vcmp.gt.s32.totalorder 0, %v521
    %v523 = vsel %vm522, 0, %v521
    %v524 = vsub.s32 32, %v523
    %v525 = vshll.u32 %v516, %v523
    %v526 = vshrl.u32 %v508, %v524
    %v527 = vor.u32 %v525, %v526
    %v528 = vsub.s32 4294967266, %v523
    %v529 = vadd.s32 %v528, 127
    %v530 = vshll.u32 %v529, 23
    %v531 = vor.u32 4788187, %v530
    %v532 = vand.u32 2147483647, %v531
    %v534 = vcvt.s32.f32 %v527
    %v535 = vmul.f32 %v534, %v532
    %v536 = vxor.u32 %v535, 2147483648
    %v537 = vsel %vm454, %v536, %v535
    %v538 = vsub.s32 4, %v514
    %v539 = vsel %vm454, %v538, %v514
    %v540 = vsel %vm453, %v138, %v537
    %v541 = vsel %vm453, 0, %v539
    %v542 = vcosq.f32.pop %v540
    %v543 = vsinq.f32.pop %v540
    %vm544 = vweird.f32 %v138
    %v545 = vand.u32 %v541, 3
    %vm546 = vcmp.lt.s32.totalorder %v545, 2
    %vm547 = vcmp.eq.s32.totalorder %v545, 0
    %v548 = vxor.u32 %v543, 2147483648
    %v549 = vsel %vm547, %v542, %v548
    %vm550 = vcmp.eq.s32.totalorder %v545, 2
    %v551 = vxor.u32 %v542, 2147483648
    %v552 = vsel %vm550, %v551, %v543
    %v553 = vsel %vm546, %v549, %v552
    %v554 = vsel %vm544, nan, %v553
    %v555 = vmul.f32 %v139, %v245
    %v556 = vmul.f32 %v140, %v348
    %v557 = vmul.f32 %v141, %v451
    %v558 = vmul.f32 %v142, %v554
    %v559 = vsel %vm71, %v555, 0.0
    %v560 = vsel %vm72, %v556, 0.0
    %v561 = vsel %vm73, %v557, 0.0
    %v562 = vsel %vm74, %v558, 0.0
    %v563 = vand.u32 2147483647, %v135
    %vm564 = vcmp.le.f32.partialorder %v563, 0.7853982
    %vm565 = vcmp.lt.s32.totalorder %v135, 0
    %v566 = vand.u32 %v135, 2139095040
    %v567 = vshrl.u32 %v566, 23
    %v568 = vsub.s32 %v567, 127
    %v569 = vand.u32 2147483647, %v135
    %v570 = vand.u32 %v569, 8388607
    %v571 = vor.u32 %v570, 8388608
    %v572 = vsub.s32 0, %v571
    %v573 = vadd.s32 %v568, 1
    %vm574 = vcmp.gt.s32.totalorder %v573, 0
    %v575 = vsel %vm574, %v573, 0
    %v576 = vshrl.u32 %v575, 5
    %v577 = vand.u32 %v575, 31
    %v578 = vsub.s32 32, %v577
    %v579 = vshrl.u32 683565275, %v578
    %v580 = vshll.u32 683565275, %v577
    %v581 = vshrl.u32 2475754826, %v578
    %v582 = vor.u32 %v580, %v581
    %v583 = vshll.u32 2475754826, %v577
    %v584 = vshrl.u32 2131351028, %v578
    %v585 = vor.u32 %v583, %v584
    %v586 = vshll.u32 2131351028, %v577
    %v587 = vshrl.u32 2102212464, %v578
    %v588 = vor.u32 %v586, %v587
    %v589 = vshll.u32 2102212464, %v577
    %v590 = vshrl.u32 920167782, %v578
    %v591 = vor.u32 %v589, %v590
    %v592 = vshll.u32 920167782, %v577
    %v593 = vshrl.u32 1326507024, %v578
    %v594 = vor.u32 %v592, %v593
    %vm595 = vcmp.lt.s32.totalorder %v576, 1
    %vm596 = vcmp.lt.s32.totalorder %v576, 2
    %vm597 = vcmp.lt.s32.totalorder %v576, 3
    %vm598 = vcmp.lt.s32.totalorder %v576, 4
    %v599 = vsel %vm595, %v579, %v582
    %v600 = vsel %vm598, %v588, 2102212464
    %v601 = vsel %vm597, %v585, %v600
    %v602 = vsel %vm596, %v599, %v601
    %v603 = vsel %vm595, %v582, %v585
    %v604 = vsel %vm598, %v591, 920167782
    %v605 = vsel %vm597, %v588, %v604
    %v606 = vsel %vm596, %v603, %v605
    %v607 = vsel %vm595, %v585, %v588
    %v608 = vsel %vm598, %v594, 1326507024
    %v609 = vsel %vm597, %v591, %v608
    %v610 = vsel %vm596, %v607, %v609
    %v611 = vshll.u32 %v571, 8
    %v612 = vmul.u32.u64.compose %v611, %v610
    %v613 = vextract.low.u32 %v612
    %v614 = vextract.high.u32 %v612
    %v615 = vmul.u32.u64.compose %v611, %v606
    %v616 = vextract.low.u32 %v615
    %v617 = vextract.high.u32 %v615
    %v618 = vmul.u32 %v611, %v602
    %v619 = vadd.s32 %v614, %v616
    %vm620 = vc.u32 %v614, %v616
    %v621 = vadd.s32 %v617, 1
    %v622 = vsel %vm620, %v621, %v617
    %v623 = vadd.s32 %v618, %v622
    %v624 = vadd.s32 %v623, 536870912
    %v625 = vshrl.u32 %v624, 30
    %v626 = vshll.u32 %v625, 30
    %v627 = vsub.s32 %v623, %v626
    %vm628 = vcmp.lt.s32.totalorder %v627, 0
    %v629 = vsub.s32 0, %v627
    %v630 = vsel %vm628, %v629, %v627
    %v631 = vclz %v630
    %v632 = vsub.s32 %v631, 2
    %vm633 = vcmp.gt.s32.totalorder 0, %v632
    %v634 = vsel %vm633, 0, %v632
    %v635 = vsub.s32 32, %v634
    %v636 = vshll.u32 %v627, %v634
    %v637 = vshrl.u32 %v619, %v635
    %v638 = vor.u32 %v636, %v637
    %v639 = vsub.s32 4294967266, %v634
    %v640 = vadd.s32 %v639, 127
    %v641 = vshll.u32 %v640, 23
    %v642 = vor.u32 4788187, %v641
    %v643 = vand.u32 2147483647, %v642
    %v645 = vcvt.s32.f32 %v638
    %v646 = vmul.f32 %v645, %v643
    %v647 = vxor.u32 %v646, 2147483648
    %v648 = vsel %vm565, %v647, %v646
    %v649 = vsub.s32 4, %v625
    %v650 = vsel %vm565, %v649, %v625
    %v651 = vsel %vm564, %v135, %v648
    %v652 = vsel %vm564, 0, %v650
    %v653 = vcosq.f32.pop %v651
    %v654 = vsinq.f32.pop %v651
    %vm655 = vweird.f32 %v135
    %v656 = vadd.s32 %v652, 3
    %v657 = vand.u32 %v656, 3
    %vm658 = vcmp.lt.s32.totalorder %v657, 2
    %vm659 = vcmp.eq.s32.totalorder %v657, 0
    %v660 = vxor.u32 %v654, 2147483648
    %v661 = vsel %vm659, %v653, %v660
    %vm662 = vcmp.eq.s32.totalorder %v657, 2
    %v663 = vxor.u32 %v653, 2147483648
    %v664 = vsel %vm662, %v663, %v654
    %v665 = vsel %vm658, %v661, %v664
    %v666 = vsel %vm655, nan, %v665
    %v667 = vand.u32 2147483647, %v136
    %vm668 = vcmp.le.f32.partialorder %v667, 0.7853982
    %vm669 = vcmp.lt.s32.totalorder %v136, 0
    %v670 = vand.u32 %v136, 2139095040
    %v671 = vshrl.u32 %v670, 23
    %v672 = vsub.s32 %v671, 127
    %v673 = vand.u32 2147483647, %v136
    %v674 = vand.u32 %v673, 8388607
    %v675 = vor.u32 %v674, 8388608
    %v676 = vsub.s32 0, %v675
    %v677 = vadd.s32 %v672, 1
    %vm678 = vcmp.gt.s32.totalorder %v677, 0
    %v679 = vsel %vm678, %v677, 0
    %v680 = vshrl.u32 %v679, 5
    %v681 = vand.u32 %v679, 31
    %v682 = vsub.s32 32, %v681
    %v683 = vshrl.u32 683565275, %v682
    %v684 = vshll.u32 683565275, %v681
    %v685 = vshrl.u32 2475754826, %v682
    %v686 = vor.u32 %v684, %v685
    %v687 = vshll.u32 2475754826, %v681
    %v688 = vshrl.u32 2131351028, %v682
    %v689 = vor.u32 %v687, %v688
    %v690 = vshll.u32 2131351028, %v681
    %v691 = vshrl.u32 2102212464, %v682
    %v692 = vor.u32 %v690, %v691
    %v693 = vshll.u32 2102212464, %v681
    %v694 = vshrl.u32 920167782, %v682
    %v695 = vor.u32 %v693, %v694
    %v696 = vshll.u32 920167782, %v681
    %v697 = vshrl.u32 1326507024, %v682
    %v698 = vor.u32 %v696, %v697
    %vm699 = vcmp.lt.s32.totalorder %v680, 1
    %vm700 = vcmp.lt.s32.totalorder %v680, 2
    %vm701 = vcmp.lt.s32.totalorder %v680, 3
    %vm702 = vcmp.lt.s32.totalorder %v680, 4
    %v703 = vsel %vm699, %v683, %v686
    %v704 = vsel %vm702, %v692, 2102212464
    %v705 = vsel %vm701, %v689, %v704
    %v706 = vsel %vm700, %v703, %v705
    %v707 = vsel %vm699, %v686, %v689
    %v708 = vsel %vm702, %v695, 920167782
    %v709 = vsel %vm701, %v692, %v708
    %v710 = vsel %vm700, %v707, %v709
    %v711 = vsel %vm699, %v689, %v692
    %v712 = vsel %vm702, %v698, 1326507024
    %v713 = vsel %vm701, %v695, %v712
    %v714 = vsel %vm700, %v711, %v713
    %v715 = vshll.u32 %v675, 8
    %v716 = vmul.u32.u64.compose %v715, %v714
    %v717 = vextract.low.u32 %v716
    %v718 = vextract.high.u32 %v716
    %v719 = vmul.u32.u64.compose %v715, %v710
    %v720 = vextract.low.u32 %v719
    %v721 = vextract.high.u32 %v719
    %v722 = vmul.u32 %v715, %v706
    %v723 = vadd.s32 %v718, %v720
    %vm724 = vc.u32 %v718, %v720
    %v725 = vadd.s32 %v721, 1
    %v726 = vsel %vm724, %v725, %v721
    %v727 = vadd.s32 %v722, %v726
    %v728 = vadd.s32 %v727, 536870912
    %v729 = vshrl.u32 %v728, 30
    %v730 = vshll.u32 %v729, 30
    %v731 = vsub.s32 %v727, %v730
    %vm732 = vcmp.lt.s32.totalorder %v731, 0
    %v733 = vsub.s32 0, %v731
    %v734 = vsel %vm732, %v733, %v731
    %v735 = vclz %v734
    %v736 = vsub.s32 %v735, 2
    %vm737 = vcmp.gt.s32.totalorder 0, %v736
    %v738 = vsel %vm737, 0, %v736
    %v739 = vsub.s32 32, %v738
    %v740 = vshll.u32 %v731, %v738
    %v741 = vshrl.u32 %v723, %v739
    %v742 = vor.u32 %v740, %v741
    %v743 = vsub.s32 4294967266, %v738
    %v744 = vadd.s32 %v743, 127
    %v745 = vshll.u32 %v744, 23
    %v746 = vor.u32 4788187, %v745
    %v747 = vand.u32 2147483647, %v746
    %v749 = vcvt.s32.f32 %v742
    %v750 = vmul.f32 %v749, %v747
    %v751 = vxor.u32 %v750, 2147483648
    %v752 = vsel %vm669, %v751, %v750
    %v753 = vsub.s32 4, %v729
    %v754 = vsel %vm669, %v753, %v729
    %v755 = vsel %vm668, %v136, %v752
    %v756 = vsel %vm668, 0, %v754
    %v757 = vcosq.f32.pop %v755
    %v758 = vsinq.f32.pop %v755
    %vm759 = vweird.f32 %v136
    %v760 = vadd.s32 %v756, 3
    %v761 = vand.u32 %v760, 3
    %vm762 = vcmp.lt.s32.totalorder %v761, 2
    %vm763 = vcmp.eq.s32.totalorder %v761, 0
    %v764 = vxor.u32 %v758, 2147483648
    %v765 = vsel %vm763, %v757, %v764
    %vm766 = vcmp.eq.s32.totalorder %v761, 2
    %v767 = vxor.u32 %v757, 2147483648
    %v768 = vsel %vm766, %v767, %v758
    %v769 = vsel %vm762, %v765, %v768
    %v770 = vsel %vm759, nan, %v769
    %v771 = vand.u32 2147483647, %v137
    %vm772 = vcmp.le.f32.partialorder %v771, 0.7853982
    %vm773 = vcmp.lt.s32.totalorder %v137, 0
    %v774 = vand.u32 %v137, 2139095040
    %v775 = vshrl.u32 %v774, 23
    %v776 = vsub.s32 %v775, 127
    %v777 = vand.u32 2147483647, %v137
    %v778 = vand.u32 %v777, 8388607
    %v779 = vor.u32 %v778, 8388608
    %v780 = vsub.s32 0, %v779
    %v781 = vadd.s32 %v776, 1
    %vm782 = vcmp.gt.s32.totalorder %v781, 0
    %v783 = vsel %vm782, %v781, 0
    %v784 = vshrl.u32 %v783, 5
    %v785 = vand.u32 %v783, 31
    %v786 = vsub.s32 32, %v785
    %v787 = vshrl.u32 683565275, %v786
    %v788 = vshll.u32 683565275, %v785
    %v789 = vshrl.u32 2475754826, %v786
    %v790 = vor.u32 %v788, %v789
    %v791 = vshll.u32 2475754826, %v785
    %v792 = vshrl.u32 2131351028, %v786
    %v793 = vor.u32 %v791, %v792
    %v794 = vshll.u32 2131351028, %v785
    %v795 = vshrl.u32 2102212464, %v786
    %v796 = vor.u32 %v794, %v795
    %v797 = vshll.u32 2102212464, %v785
    %v798 = vshrl.u32 920167782, %v786
    %v799 = vor.u32 %v797, %v798
    %v800 = vshll.u32 920167782, %v785
    %v801 = vshrl.u32 1326507024, %v786
    %v802 = vor.u32 %v800, %v801
    %vm803 = vcmp.lt.s32.totalorder %v784, 1
    %vm804 = vcmp.lt.s32.totalorder %v784, 2
    %vm805 = vcmp.lt.s32.totalorder %v784, 3
    %vm806 = vcmp.lt.s32.totalorder %v784, 4
    %v807 = vsel %vm803, %v787, %v790
    %v808 = vsel %vm806, %v796, 2102212464
    %v809 = vsel %vm805, %v793, %v808
    %v810 = vsel %vm804, %v807, %v809
    %v811 = vsel %vm803, %v790, %v793
    %v812 = vsel %vm806, %v799, 920167782
    %v813 = vsel %vm805, %v796, %v812
    %v814 = vsel %vm804, %v811, %v813
    %v815 = vsel %vm803, %v793, %v796
    %v816 = vsel %vm806, %v802, 1326507024
    %v817 = vsel %vm805, %v799, %v816
    %v818 = vsel %vm804, %v815, %v817
    %v819 = vshll.u32 %v779, 8
    %v820 = vmul.u32.u64.compose %v819, %v818
    %v821 = vextract.low.u32 %v820
    %v822 = vextract.high.u32 %v820
    %v823 = vmul.u32.u64.compose %v819, %v814
    %v824 = vextract.low.u32 %v823
    %v825 = vextract.high.u32 %v823
    %v826 = vmul.u32 %v819, %v810
    %v827 = vadd.s32 %v822, %v824
    %vm828 = vc.u32 %v822, %v824
    %v829 = vadd.s32 %v825, 1
    %v830 = vsel %vm828, %v829, %v825
    %v831 = vadd.s32 %v826, %v830
    %v832 = vadd.s32 %v831, 536870912
    %v833 = vshrl.u32 %v832, 30
    %v834 = vshll.u32 %v833, 30
    %v835 = vsub.s32 %v831, %v834
    %vm836 = vcmp.lt.s32.totalorder %v835, 0
    %v837 = vsub.s32 0, %v835
    %v838 = vsel %vm836, %v837, %v835
    %v839 = vclz %v838
    %v840 = vsub.s32 %v839, 2
    %vm841 = vcmp.gt.s32.totalorder 0, %v840
    %v842 = vsel %vm841, 0, %v840
    %v843 = vsub.s32 32, %v842
    %v844 = vshll.u32 %v835, %v842
    %v845 = vshrl.u32 %v827, %v843
    %v846 = vor.u32 %v844, %v845
    %v847 = vsub.s32 4294967266, %v842
    %v848 = vadd.s32 %v847, 127
    %v849 = vshll.u32 %v848, 23
    %v850 = vor.u32 4788187, %v849
    %v851 = vand.u32 2147483647, %v850
    %v853 = vcvt.s32.f32 %v846
    %v854 = vmul.f32 %v853, %v851
    %v855 = vxor.u32 %v854, 2147483648
    %v856 = vsel %vm773, %v855, %v854
    %v857 = vsub.s32 4, %v833
    %v858 = vsel %vm773, %v857, %v833
    %v859 = vsel %vm772, %v137, %v856
    %v860 = vsel %vm772, 0, %v858
    %v861 = vcosq.f32.pop %v859
    %v862 = vsinq.f32.pop %v859
    %vm863 = vweird.f32 %v137
    %v864 = vadd.s32 %v860, 3
    %v865 = vand.u32 %v864, 3
    %vm866 = vcmp.lt.s32.totalorder %v865, 2
    %vm867 = vcmp.eq.s32.totalorder %v865, 0
    %v868 = vxor.u32 %v862, 2147483648
    %v869 = vsel %vm867, %v861, %v868
    %vm870 = vcmp.eq.s32.totalorder %v865, 2
    %v871 = vxor.u32 %v861, 2147483648
    %v872 = vsel %vm870, %v871, %v862
    %v873 = vsel %vm866, %v869, %v872
    %v874 = vsel %vm863, nan, %v873
    %v875 = vand.u32 2147483647, %v138
    %vm876 = vcmp.le.f32.partialorder %v875, 0.7853982
    %vm877 = vcmp.lt.s32.totalorder %v138, 0
    %v878 = vand.u32 %v138, 2139095040
    %v879 = vshrl.u32 %v878, 23
    %v880 = vsub.s32 %v879, 127
    %v881 = vand.u32 2147483647, %v138
    %v882 = vand.u32 %v881, 8388607
    %v883 = vor.u32 %v882, 8388608
    %v884 = vsub.s32 0, %v883
    %v885 = vadd.s32 %v880, 1
    %vm886 = vcmp.gt.s32.totalorder %v885, 0
    %v887 = vsel %vm886, %v885, 0
    %v888 = vshrl.u32 %v887, 5
    %v889 = vand.u32 %v887, 31
    %v890 = vsub.s32 32, %v889
    %v891 = vshrl.u32 683565275, %v890
    %v892 = vshll.u32 683565275, %v889
    %v893 = vshrl.u32 2475754826, %v890
    %v894 = vor.u32 %v892, %v893
    %v895 = vshll.u32 2475754826, %v889
    %v896 = vshrl.u32 2131351028, %v890
    %v897 = vor.u32 %v895, %v896
    %v898 = vshll.u32 2131351028, %v889
    %v899 = vshrl.u32 2102212464, %v890
    %v900 = vor.u32 %v898, %v899
    %v901 = vshll.u32 2102212464, %v889
    %v902 = vshrl.u32 920167782, %v890
    %v903 = vor.u32 %v901, %v902
    %v904 = vshll.u32 920167782, %v889
    %v905 = vshrl.u32 1326507024, %v890
    %v906 = vor.u32 %v904, %v905
    %vm907 = vcmp.lt.s32.totalorder %v888, 1
    %vm908 = vcmp.lt.s32.totalorder %v888, 2
    %vm909 = vcmp.lt.s32.totalorder %v888, 3
    %vm910 = vcmp.lt.s32.totalorder %v888, 4
    %v911 = vsel %vm907, %v891, %v894
    %v912 = vsel %vm910, %v900, 2102212464
    %v913 = vsel %vm909, %v897, %v912
    %v914 = vsel %vm908, %v911, %v913
    %v915 = vsel %vm907, %v894, %v897
    %v916 = vsel %vm910, %v903, 920167782
    %v917 = vsel %vm909, %v900, %v916
    %v918 = vsel %vm908, %v915, %v917
    %v919 = vsel %vm907, %v897, %v900
    %v920 = vsel %vm910, %v906, 1326507024
    %v921 = vsel %vm909, %v903, %v920
    %v922 = vsel %vm908, %v919, %v921
    %v923 = vshll.u32 %v883, 8
    %v924 = vmul.u32.u64.compose %v923, %v922
    %v925 = vextract.low.u32 %v924
    %v926 = vextract.high.u32 %v924
    %v927 = vmul.u32.u64.compose %v923, %v918
    %v928 = vextract.low.u32 %v927
    %v929 = vextract.high.u32 %v927
    %v930 = vmul.u32 %v923, %v914
    %v931 = vadd.s32 %v926, %v928
    %vm932 = vc.u32 %v926, %v928
    %v933 = vadd.s32 %v929, 1
    %v934 = vsel %vm932, %v933, %v929
    %v935 = vadd.s32 %v930, %v934
    %v936 = vadd.s32 %v935, 536870912
    %v937 = vshrl.u32 %v936, 30
    %v938 = vshll.u32 %v937, 30
    %v939 = vsub.s32 %v935, %v938
    %vm940 = vcmp.lt.s32.totalorder %v939, 0
    %v941 = vsub.s32 0, %v939
    %v942 = vsel %vm940, %v941, %v939
    %v943 = vclz %v942
    %v944 = vsub.s32 %v943, 2
    %vm945 = vcmp.gt.s32.totalorder 0, %v944
    %v946 = vsel %vm945, 0, %v944
    %v947 = vsub.s32 32, %v946
    %v948 = vshll.u32 %v939, %v946
    %v949 = vshrl.u32 %v931, %v947
    %v950 = vor.u32 %v948, %v949
    %v951 = vsub.s32 4294967266, %v946
    %v952 = vadd.s32 %v951, 127
    %v953 = vshll.u32 %v952, 23
    %v954 = vor.u32 4788187, %v953
    %v955 = vand.u32 2147483647, %v954
    %v957 = vcvt.s32.f32 %v950
    %v958 = vmul.f32 %v957, %v955
    %v959 = vxor.u32 %v958, 2147483648
    %v960 = vsel %vm877, %v959, %v958
    %v961 = vsub.s32 4, %v937
    %v962 = vsel %vm877, %v961, %v937
    %v963 = vsel %vm876, %v138, %v960
    %v964 = vsel %vm876, 0, %v962
    %v965 = vcosq.f32.pop %v963
    %v966 = vsinq.f32.pop %v963
    %vm967 = vweird.f32 %v138
    %v968 = vadd.s32 %v964, 3
    %v969 = vand.u32 %v968, 3
    %vm970 = vcmp.lt.s32.totalorder %v969, 2
    %vm971 = vcmp.eq.s32.totalorder %v969, 0
    %v972 = vxor.u32 %v966, 2147483648
    %v973 = vsel %vm971, %v965, %v972
    %vm974 = vcmp.eq.s32.totalorder %v969, 2
    %v975 = vxor.u32 %v965, 2147483648
    %v976 = vsel %vm974, %v975, %v966
    %v977 = vsel %vm970, %v973, %v976
    %v978 = vsel %vm967, nan, %v977
    %v979 = vmul.f32 %v139, %v666
    %v980 = vmul.f32 %v140, %v770
    %v981 = vmul.f32 %v141, %v874
    %v982 = vmul.f32 %v142, %v978
    %v983 = vsel %vm71, %v979, 0.0
    %v984 = vsel %vm72, %v980, 0.0
    %v985 = vsel %vm73, %v981, 0.0
    %v986 = vsel %vm74, %v982, 0.0
    %v987 = vld [vmem:[#allocation2] sm:$0xff]
    %v988 = vld [vmem:[#allocation2 + $0x8] sm:$0xff]
    %v989 = vld [vmem:[#allocation2 + $0x10] sm:$0xff]
    %v990 = vld [vmem:[#allocation2 + $0x18] sm:$0xff]
    %s991 = scalar_lea.vmem [#allocation2], 32
    %v992 = vld [vmem:[%s991] sm:$0xff]
    %v993 = vld [vmem:[%s991 + $0x8] sm:$0xff]
    %v994 = vld [vmem:[%s991 + $0x10] sm:$0xff]
    %v995 = vld [vmem:[%s991 + $0x18] sm:$0xff]
    %s996 = scalar_lea.vmem [#allocation2], 64
    %v997 = vld [vmem:[%s996] sm:$0xff]
    %v998 = vld [vmem:[%s996 + $0x8] sm:$0xff]
    %v999 = vld [vmem:[%s996 + $0x10] sm:$0xff]
    %v1000 = vld [vmem:[%s996 + $0x18] sm:$0xff]
    %s1001 = scalar_lea.vmem [#allocation2], 96
    %v1002 = vld [vmem:[%s1001] sm:$0xff]
    %v1003 = vld [vmem:[%s1001 + $0x8] sm:$0xff]
    %v1004 = vld [vmem:[%s1001 + $0x10] sm:$0xff]
    %v1005 = vld [vmem:[%s1001 + $0x18] sm:$0xff]
    %s1006 = scalar_lea.vmem [#allocation2], 128
    %v1007 = vld [vmem:[%s1006] sm:$0xff]
    %v1008 = vld [vmem:[%s1006 + $0x8] sm:$0xff]
    %v1009 = vld [vmem:[%s1006 + $0x10] sm:$0xff]
    %v1010 = vld [vmem:[%s1006 + $0x18] sm:$0xff]
    %s1011 = scalar_lea.vmem [#allocation2], 160
    %v1012 = vld [vmem:[%s1011] sm:$0xff]
    %v1013 = vld [vmem:[%s1011 + $0x8] sm:$0xff]
    %v1014 = vld [vmem:[%s1011 + $0x10] sm:$0xff]
    %v1015 = vld [vmem:[%s1011 + $0x18] sm:$0xff]
    %s1016 = scalar_lea.vmem [#allocation2], 192
    %v1017 = vld [vmem:[%s1016] sm:$0xff]
    %v1018 = vld [vmem:[%s1016 + $0x8] sm:$0xff]
    %v1019 = vld [vmem:[%s1016 + $0x10] sm:$0xff]
    %v1020 = vld [vmem:[%s1016 + $0x18] sm:$0xff]
    %s1021 = scalar_lea.vmem [#allocation2], 224
    %v1022 = vld [vmem:[%s1021] sm:$0xff]
    %v1023 = vld [vmem:[%s1021 + $0x8] sm:$0xff]
    %v1024 = vld [vmem:[%s1021 + $0x10] sm:$0xff]
    %v1025 = vld [vmem:[%s1021 + $0x18] sm:$0xff]
    %s1026 = scalar_lea.vmem [#allocation2], 256
    %v1027 = vld [vmem:[%s1026] sm:$0xff]
    %v1028 = vld [vmem:[%s1026 + $0x8] sm:$0xff]
    %v1029 = vld [vmem:[%s1026 + $0x10] sm:$0xff]
    %v1030 = vld [vmem:[%s1026 + $0x18] sm:$0xff]
    %s1031 = scalar_lea.vmem [#allocation2], 288
    %v1032 = vld [vmem:[%s1031] sm:$0xff]
    %v1033 = vld [vmem:[%s1031 + $0x8] sm:$0xff]
    %v1034 = vld [vmem:[%s1031 + $0x10] sm:$0xff]
    %v1035 = vld [vmem:[%s1031 + $0x18] sm:$0xff]
    %s1036 = scalar_lea.vmem [#allocation2], 320
    %v1037 = vld [vmem:[%s1036] sm:$0xff]
    %v1038 = vld [vmem:[%s1036 + $0x8] sm:$0xff]
    %v1039 = vld [vmem:[%s1036 + $0x10] sm:$0xff]
    %v1040 = vld [vmem:[%s1036 + $0x18] sm:$0xff]
    %s1041 = scalar_lea.vmem [#allocation2], 352
    %v1042 = vld [vmem:[%s1041] sm:$0xff]
    %v1043 = vld [vmem:[%s1041 + $0x8] sm:$0xff]
    %v1044 = vld [vmem:[%s1041 + $0x10] sm:$0xff]
    %v1045 = vld [vmem:[%s1041 + $0x18] sm:$0xff]
    %s1046 = scalar_lea.vmem [#allocation2], 384
    %v1047 = vld [vmem:[%s1046] sm:$0xff]
    %v1048 = vld [vmem:[%s1046 + $0x8] sm:$0xff]
    %v1049 = vld [vmem:[%s1046 + $0x10] sm:$0xff]
    %v1050 = vld [vmem:[%s1046 + $0x18] sm:$0xff]
    %s1051 = scalar_lea.vmem [#allocation2], 416
    %v1052 = vld [vmem:[%s1051] sm:$0xff]
    %v1053 = vld [vmem:[%s1051 + $0x8] sm:$0xff]
    %v1054 = vld [vmem:[%s1051 + $0x10] sm:$0xff]
    %v1055 = vld [vmem:[%s1051 + $0x18] sm:$0xff]
    %s1056 = scalar_lea.vmem [#allocation2], 448
    %v1057 = vld [vmem:[%s1056] sm:$0xff]
    %v1058 = vld [vmem:[%s1056 + $0x8] sm:$0xff]
    %v1059 = vld [vmem:[%s1056 + $0x10] sm:$0xff]
    %v1060 = vld [vmem:[%s1056 + $0x18] sm:$0xff]
    %s1061 = scalar_lea.vmem [#allocation2], 480
    %v1062 = vld [vmem:[%s1061] sm:$0xff]
    %v1063 = vld [vmem:[%s1061 + $0x8] sm:$0xff]
    %v1064 = vld [vmem:[%s1061 + $0x10] sm:$0xff]
    %v1065 = vld [vmem:[%s1061 + $0x18] sm:$0xff]
    %v1066 = vmul.f32 %v1027, 1.442695
    %v1067 = vpow.pop %v1066
    %v1068 = vmul.f32 %v1028, 1.442695
    %v1069 = vpow.pop %v1068
    %v1070 = vmul.f32 %v1029, 1.442695
    %v1071 = vpow.pop %v1070
    %v1072 = vmul.f32 %v1030, 1.442695
    %v1073 = vpow.pop %v1072
    %v1074 = vmul.f32 %v1032, 1.442695
    %v1075 = vpow.pop %v1074
    %v1076 = vmul.f32 %v1033, 1.442695
    %v1077 = vpow.pop %v1076
    %v1078 = vmul.f32 %v1034, 1.442695
    %v1079 = vpow.pop %v1078
    %v1080 = vmul.f32 %v1035, 1.442695
    %v1081 = vpow.pop %v1080
    %v1082 = vmul.f32 %v1037, 1.442695
    %v1083 = vpow.pop %v1082
    %v1084 = vmul.f32 %v1038, 1.442695
    %v1085 = vpow.pop %v1084
    %v1086 = vmul.f32 %v1039, 1.442695
    %v1087 = vpow.pop %v1086
    %v1088 = vmul.f32 %v1040, 1.442695
    %v1089 = vpow.pop %v1088
    %v1090 = vmul.f32 %v1042, 1.442695
    %v1091 = vpow.pop %v1090
    %v1092 = vmul.f32 %v1043, 1.442695
    %v1093 = vpow.pop %v1092
    %v1094 = vmul.f32 %v1044, 1.442695
    %v1095 = vpow.pop %v1094
    %v1096 = vmul.f32 %v1045, 1.442695
    %v1097 = vpow.pop %v1096
    %v1098 = vmul.f32 %v1047, 1.442695
    %v1099 = vpow.pop %v1098
    %v1100 = vmul.f32 %v1048, 1.442695
    %v1101 = vpow.pop %v1100
    %v1102 = vmul.f32 %v1049, 1.442695
    %v1103 = vpow.pop %v1102
    %v1104 = vmul.f32 %v1050, 1.442695
    %v1105 = vpow.pop %v1104
    %v1106 = vmul.f32 %v1052, 1.442695
    %v1107 = vpow.pop %v1106
    %v1108 = vmul.f32 %v1053, 1.442695
    %v1109 = vpow.pop %v1108
    %v1110 = vmul.f32 %v1054, 1.442695
    %v1111 = vpow.pop %v1110
    %v1112 = vmul.f32 %v1055, 1.442695
    %v1113 = vpow.pop %v1112
    %v1114 = vmul.f32 %v1057, 1.442695
    %v1115 = vpow.pop %v1114
    %v1116 = vmul.f32 %v1058, 1.442695
    %v1117 = vpow.pop %v1116
    %v1118 = vmul.f32 %v1059, 1.442695
    %v1119 = vpow.pop %v1118
    %v1120 = vmul.f32 %v1060, 1.442695
    %v1121 = vpow.pop %v1120
    %v1122 = vmul.f32 %v1062, 1.442695
    %v1123 = vpow.pop %v1122
    %v1124 = vmul.f32 %v1063, 1.442695
    %v1125 = vpow.pop %v1124
    %v1126 = vmul.f32 %v1064, 1.442695
    %v1127 = vpow.pop %v1126
    %v1128 = vmul.f32 %v1065, 1.442695
    %v1129 = vpow.pop %v1128
    %v1130 = vmul.f32 %v1027, -2.0
    %v1131 = vmul.f32 %v1028, -2.0
    %v1132 = vmul.f32 %v1029, -2.0
    %v1133 = vmul.f32 %v1030, -2.0
    %v1134 = vmul.f32 %v1130, 1.442695
    %v1135 = vpow.pop %v1134
    %v1136 = vmul.f32 %v1131, 1.442695
    %v1137 = vpow.pop %v1136
    %v1138 = vmul.f32 %v1132, 1.442695
    %v1139 = vpow.pop %v1138
    %v1140 = vmul.f32 %v1133, 1.442695
    %v1141 = vpow.pop %v1140
    %v1142 = vmul.f32 %v1032, -2.0
    %v1143 = vmul.f32 %v1033, -2.0
    %v1144 = vmul.f32 %v1034, -2.0
    %v1145 = vmul.f32 %v1035, -2.0
    %v1146 = vmul.f32 %v1142, 1.442695
    %v1147 = vpow.pop %v1146
    %v1148 = vmul.f32 %v1143, 1.442695
    %v1149 = vpow.pop %v1148
    %v1150 = vmul.f32 %v1144, 1.442695
    %v1151 = vpow.pop %v1150
    %v1152 = vmul.f32 %v1145, 1.442695
    %v1153 = vpow.pop %v1152
    %v1154 = vmul.f32 %v1037, -2.0
    %v1155 = vmul.f32 %v1038, -2.0
    %v1156 = vmul.f32 %v1039, -2.0
    %v1157 = vmul.f32 %v1040, -2.0
    %v1158 = vmul.f32 %v1154, 1.442695
    %v1159 = vpow.pop %v1158
    %v1160 = vmul.f32 %v1155, 1.442695
    %v1161 = vpow.pop %v1160
    %v1162 = vmul.f32 %v1156, 1.442695
    %v1163 = vpow.pop %v1162
    %v1164 = vmul.f32 %v1157, 1.442695
    %v1165 = vpow.pop %v1164
    %v1166 = vmul.f32 %v1042, -2.0
    %v1167 = vmul.f32 %v1043, -2.0
    %v1168 = vmul.f32 %v1044, -2.0
    %v1169 = vmul.f32 %v1045, -2.0
    %v1170 = vmul.f32 %v1166, 1.442695
    %v1171 = vpow.pop %v1170
    %v1172 = vmul.f32 %v1167, 1.442695
    %v1173 = vpow.pop %v1172
    %v1174 = vmul.f32 %v1168, 1.442695
    %v1175 = vpow.pop %v1174
    %v1176 = vmul.f32 %v1169, 1.442695
    %v1177 = vpow.pop %v1176
    %v1178 = vmul.f32 %v1047, -2.0
    %v1179 = vmul.f32 %v1048, -2.0
    %v1180 = vmul.f32 %v1049, -2.0
    %v1181 = vmul.f32 %v1050, -2.0
    %v1182 = vmul.f32 %v1178, 1.442695
    %v1183 = vpow.pop %v1182
    %v1184 = vmul.f32 %v1179, 1.442695
    %v1185 = vpow.pop %v1184
    %v1186 = vmul.f32 %v1180, 1.442695
    %v1187 = vpow.pop %v1186
    %v1188 = vmul.f32 %v1181, 1.442695
    %v1189 = vpow.pop %v1188
    %v1190 = vmul.f32 %v1052, -2.0
    %v1191 = vmul.f32 %v1053, -2.0
    %v1192 = vmul.f32 %v1054, -2.0
    %v1193 = vmul.f32 %v1055, -2.0
    %v1194 = vmul.f32 %v1190, 1.442695
    %v1195 = vpow.pop %v1194
    %v1196 = vmul.f32 %v1191, 1.442695
    %v1197 = vpow.pop %v1196
    %v1198 = vmul.f32 %v1192, 1.442695
    %v1199 = vpow.pop %v1198
    %v1200 = vmul.f32 %v1193, 1.442695
    %v1201 = vpow.pop %v1200
    %v1202 = vmul.f32 %v1057, -2.0
    %v1203 = vmul.f32 %v1058, -2.0
    %v1204 = vmul.f32 %v1059, -2.0
    %v1205 = vmul.f32 %v1060, -2.0
    %v1206 = vmul.f32 %v1202, 1.442695
    %v1207 = vpow.pop %v1206
    %v1208 = vmul.f32 %v1203, 1.442695
    %v1209 = vpow.pop %v1208
    %v1210 = vmul.f32 %v1204, 1.442695
    %v1211 = vpow.pop %v1210
    %v1212 = vmul.f32 %v1205, 1.442695
    %v1213 = vpow.pop %v1212
    %v1214 = vmul.f32 %v1062, -2.0
    %v1215 = vmul.f32 %v1063, -2.0
    %v1216 = vmul.f32 %v1064, -2.0
    %v1217 = vmul.f32 %v1065, -2.0
    %v1218 = vmul.f32 %v1214, 1.442695
    %v1219 = vpow.pop %v1218
    %v1220 = vmul.f32 %v1215, 1.442695
    %v1221 = vpow.pop %v1220
    %v1222 = vmul.f32 %v1216, 1.442695
    %v1223 = vpow.pop %v1222
    %v1224 = vmul.f32 %v1217, 1.442695
    %v1225 = vpow.pop %v1224
    %v1226 = vadd.f32 %v1067, %v1083
    %v1227 = vadd.f32 %v1069, %v1085
    %v1228 = vadd.f32 %v1071, %v1087
    %v1229 = vadd.f32 %v1073, %v1089
    %v1230 = vadd.f32 %v1075, %v1091
    %v1231 = vadd.f32 %v1077, %v1093
    %v1232 = vadd.f32 %v1079, %v1095
    %v1233 = vadd.f32 %v1081, %v1097
    %v1234 = vadd.f32 %v987, %v997
    %v1235 = vadd.f32 %v988, %v998
    %v1236 = vadd.f32 %v989, %v999
    %v1237 = vadd.f32 %v990, %v1000
    %v1238 = vadd.f32 %v992, %v1002
    %v1239 = vadd.f32 %v993, %v1003
    %v1240 = vadd.f32 %v994, %v1004
    %v1241 = vadd.f32 %v995, %v1005
    %v1242 = vadd.f32 %v1226, %v1099
    %v1243 = vadd.f32 %v1227, %v1101
    %v1244 = vadd.f32 %v1228, %v1103
    %v1245 = vadd.f32 %v1229, %v1105
    %v1246 = vadd.f32 %v1230, %v1107
    %v1247 = vadd.f32 %v1231, %v1109
    %v1248 = vadd.f32 %v1232, %v1111
    %v1249 = vadd.f32 %v1233, %v1113
    %v1250 = vadd.f32 %v1234, %v1007
    %v1251 = vadd.f32 %v1235, %v1008
    %v1252 = vadd.f32 %v1236, %v1009
    %v1253 = vadd.f32 %v1237, %v1010
    %v1254 = vadd.f32 %v1238, %v1012
    %v1255 = vadd.f32 %v1239, %v1013
    %v1256 = vadd.f32 %v1240, %v1014
    %v1257 = vadd.f32 %v1241, %v1015
    %v1258 = vadd.f32 %v1242, %v1115
    %v1259 = vadd.f32 %v1243, %v1117
    %v1260 = vadd.f32 %v1244, %v1119
    %v1261 = vadd.f32 %v1245, %v1121
    %v1262 = vadd.f32 %v1246, %v1123
    %v1263 = vadd.f32 %v1247, %v1125
    %v1264 = vadd.f32 %v1248, %v1127
    %v1265 = vadd.f32 %v1249, %v1129
    %v1266 = vadd.f32 %v1250, %v1017
    %v1267 = vadd.f32 %v1251, %v1018
    %v1268 = vadd.f32 %v1252, %v1019
    %v1269 = vadd.f32 %v1253, %v1020
    %v1270 = vadd.f32 %v1254, %v1022
    %v1271 = vadd.f32 %v1255, %v1023
    %v1272 = vadd.f32 %v1256, %v1024
    %v1273 = vadd.f32 %v1257, %v1025
    %s1274 = scalar_lea.vmem [#allocation2], 704
    %v1275 = vld [vmem:[%s1274] sm:$0xff]
    %v1276 = vld [vmem:[%s1274 + $0x8] sm:$0xff]
    %v1277 = vld [vmem:[%s1274 + $0x10] sm:$0xff]
    %v1278 = vld [vmem:[%s1274 + $0x18] sm:$0xff]
    %v1279 = vmul.f32 %v1275, %v1258
    %v1280 = vmul.f32 %v1276, %v1259
    %v1281 = vmul.f32 %v1277, %v1260
    %v1282 = vmul.f32 %v1278, %v1261
    %v1283 = vadd.f32 %v1279, %v1266
    %v1284 = vadd.f32 %v1280, %v1267
    %v1285 = vadd.f32 %v1281, %v1268
    %v1286 = vadd.f32 %v1282, %v1269
    %s1287 = scalar_lea.vmem [#allocation2], 736
    %v1288 = vld [vmem:[%s1287] sm:$0xff]
    %v1289 = vld [vmem:[%s1287 + $0x8] sm:$0xff]
    %v1290 = vld [vmem:[%s1287 + $0x10] sm:$0xff]
    %v1291 = vld [vmem:[%s1287 + $0x18] sm:$0xff]
    %v1292 = vmul.f32 %v1288, %v1262
    %v1293 = vmul.f32 %v1289, %v1263
    %v1294 = vmul.f32 %v1290, %v1264
    %v1295 = vmul.f32 %v1291, %v1265
    %v1296 = vadd.f32 %v1292, %v1270
    %v1297 = vadd.f32 %v1293, %v1271
    %v1298 = vadd.f32 %v1294, %v1272
    %v1299 = vadd.f32 %v1295, %v1273
    %v1300 = vsel %vm33, %v559, %v1283
    %v1301 = vsel %vm34, %v560, %v1284
    %v1302 = vsel %vm35, %v561, %v1285
    %v1303 = vsel %vm36, %v562, %v1286
    %v1304 = vsel %vm33, %v983, %v1296
    %v1305 = vsel %vm34, %v984, %v1297
    %v1306 = vsel %vm35, %v985, %v1298
    %v1307 = vsel %vm36, %v986, %v1299
    %1308 = vst [vmem:[#allocation5] sm:$0xff] %v1300
    %1309 = vst [vmem:[#allocation5 + $0x8] sm:$0xff] %v1301
    %1310 = vst [vmem:[#allocation5 + $0x10] sm:$0xff] %v1302
    %1311 = vst [vmem:[#allocation5 + $0x18] sm:$0xff] %v1303
    %s1312 = scalar_lea.vmem [#allocation5], 32
    %1313 = vst [vmem:[%s1312] sm:$0xff] %v1304
    %1314 = vst [vmem:[%s1312 + $0x8] sm:$0xff] %v1305
    %1315 = vst [vmem:[%s1312 + $0x10] sm:$0xff] %v1306
    %1316 = vst [vmem:[%s1312 + $0x18] sm:$0xff] %v1307
    %v1317 = vsub.f32 %v1300, %v987
    %v1318 = vsub.f32 %v1301, %v988
    %v1319 = vsub.f32 %v1302, %v989
    %v1320 = vsub.f32 %v1303, %v990
    %v1321 = vsub.f32 %v1304, %v992
    %v1322 = vsub.f32 %v1305, %v993
    %v1323 = vsub.f32 %v1306, %v994
    %v1324 = vsub.f32 %v1307, %v995
    %v1325 = vmul.f32 %v1317, %v1317
    %v1326 = vmul.f32 %v1318, %v1318
    %v1327 = vmul.f32 %v1319, %v1319
    %v1328 = vmul.f32 %v1320, %v1320
    %v1329 = vmul.f32 %v1325, %v1135
    %v1330 = vmul.f32 %v1326, %v1137
    %v1331 = vmul.f32 %v1327, %v1139
    %v1332 = vmul.f32 %v1328, %v1141
    %v1333 = vmul.f32 %v1321, %v1321
    %v1334 = vmul.f32 %v1322, %v1322
    %v1335 = vmul.f32 %v1323, %v1323
    %v1336 = vmul.f32 %v1324, %v1324
    %v1337 = vmul.f32 %v1333, %v1147
    %v1338 = vmul.f32 %v1334, %v1149
    %v1339 = vmul.f32 %v1335, %v1151
    %v1340 = vmul.f32 %v1336, %v1153
    %v1341 = vadd.f32 %v1329, %v1337
    %v1342 = vadd.f32 %v1330, %v1338
    %v1343 = vadd.f32 %v1331, %v1339
    %v1344 = vadd.f32 %v1332, %v1340
    %v1345 = vadd.f32 %v1027, %v1032
    %v1346 = vadd.f32 %v1028, %v1033
    %v1347 = vadd.f32 %v1029, %v1034
    %v1348 = vadd.f32 %v1030, %v1035
    %s1349 = scalar_lea.vmem [#allocation2], 512
    %v1350 = vld [vmem:[%s1349] sm:$0xff]
    %v1351 = vld [vmem:[%s1349 + $0x8] sm:$0xff]
    %v1352 = vld [vmem:[%s1349 + $0x10] sm:$0xff]
    %v1353 = vld [vmem:[%s1349 + $0x18] sm:$0xff]
    %v1354 = vadd.f32 %v1350, 1e-05
    %v1355 = vadd.f32 %v1351, 1e-05
    %v1356 = vadd.f32 %v1352, 1e-05
    %v1357 = vadd.f32 %v1353, 1e-05
    %v1358 = vlog2.pop %v1354
    %v1359 = vmul.f32 %v1358, 0.6931472
    %v1360 = vlog2.pop %v1355
    %v1361 = vmul.f32 %v1360, 0.6931472
    %v1362 = vlog2.pop %v1356
    %v1363 = vmul.f32 %v1362, 0.6931472
    %v1364 = vlog2.pop %v1357
    %v1365 = vmul.f32 %v1364, 0.6931472
    %v1366 = vadd.f32 %v1359, -1.837877
    %v1367 = vadd.f32 %v1361, -1.837877
    %v1368 = vadd.f32 %v1363, -1.837877
    %v1369 = vadd.f32 %v1365, -1.837877
    %v1370 = vmul.f32 %v1341, 0.5
    %v1371 = vmul.f32 %v1342, 0.5
    %v1372 = vmul.f32 %v1343, 0.5
    %v1373 = vmul.f32 %v1344, 0.5
    %v1374 = vsub.f32 %v1366, %v1370
    %v1375 = vsub.f32 %v1367, %v1371
    %v1376 = vsub.f32 %v1368, %v1372
    %v1377 = vsub.f32 %v1369, %v1373
    %v1378 = vsub.f32 %v1374, %v1345
    %v1379 = vsub.f32 %v1375, %v1346
    %v1380 = vsub.f32 %v1376, %v1347
    %v1381 = vsub.f32 %v1377, %v1348
    %v1382 = vsub.f32 %v1300, %v997
    %v1383 = vsub.f32 %v1301, %v998
    %v1384 = vsub.f32 %v1302, %v999
    %v1385 = vsub.f32 %v1303, %v1000
    %v1386 = vsub.f32 %v1304, %v1002
    %v1387 = vsub.f32 %v1305, %v1003
    %v1388 = vsub.f32 %v1306, %v1004
    %v1389 = vsub.f32 %v1307, %v1005
    %v1390 = vmul.f32 %v1382, %v1382
    %v1391 = vmul.f32 %v1383, %v1383
    %v1392 = vmul.f32 %v1384, %v1384
    %v1393 = vmul.f32 %v1385, %v1385
    %v1394 = vmul.f32 %v1390, %v1159
    %v1395 = vmul.f32 %v1391, %v1161
    %v1396 = vmul.f32 %v1392, %v1163
    %v1397 = vmul.f32 %v1393, %v1165
    %v1398 = vmul.f32 %v1386, %v1386
    %v1399 = vmul.f32 %v1387, %v1387
    %v1400 = vmul.f32 %v1388, %v1388
    %v1401 = vmul.f32 %v1389, %v1389
    %v1402 = vmul.f32 %v1398, %v1171
    %v1403 = vmul.f32 %v1399, %v1173
    %v1404 = vmul.f32 %v1400, %v1175
    %v1405 = vmul.f32 %v1401, %v1177
    %v1406 = vadd.f32 %v1394, %v1402
    %v1407 = vadd.f32 %v1395, %v1403
    %v1408 = vadd.f32 %v1396, %v1404
    %v1409 = vadd.f32 %v1397, %v1405
    %v1410 = vadd.f32 %v1037, %v1042
    %v1411 = vadd.f32 %v1038, %v1043
    %v1412 = vadd.f32 %v1039, %v1044
    %v1413 = vadd.f32 %v1040, %v1045
    %s1414 = scalar_lea.vmem [#allocation2], 544
    %v1415 = vld [vmem:[%s1414] sm:$0xff]
    %v1416 = vld [vmem:[%s1414 + $0x8] sm:$0xff]
    %v1417 = vld [vmem:[%s1414 + $0x10] sm:$0xff]
    %v1418 = vld [vmem:[%s1414 + $0x18] sm:$0xff]
    %v1419 = vadd.f32 %v1415, 1e-05
    %v1420 = vadd.f32 %v1416, 1e-05
    %v1421 = vadd.f32 %v1417, 1e-05
    %v1422 = vadd.f32 %v1418, 1e-05
    %v1423 = vlog2.pop %v1419
    %v1424 = vmul.f32 %v1423, 0.6931472
    %v1425 = vlog2.pop %v1420
    %v1426 = vmul.f32 %v1425, 0.6931472
    %v1427 = vlog2.pop %v1421
    %v1428 = vmul.f32 %v1427, 0.6931472
    %v1429 = vlog2.pop %v1422
    %v1430 = vmul.f32 %v1429, 0.6931472
    %v1431 = vadd.f32 %v1424, -1.837877
    %v1432 = vadd.f32 %v1426, -1.837877
    %v1433 = vadd.f32 %v1428, -1.837877
    %v1434 = vadd.f32 %v1430, -1.837877
    %v1435 = vmul.f32 %v1406, 0.5
    %v1436 = vmul.f32 %v1407, 0.5
    %v1437 = vmul.f32 %v1408, 0.5
    %v1438 = vmul.f32 %v1409, 0.5
    %v1439 = vsub.f32 %v1431, %v1435
    %v1440 = vsub.f32 %v1432, %v1436
    %v1441 = vsub.f32 %v1433, %v1437
    %v1442 = vsub.f32 %v1434, %v1438
    %v1443 = vsub.f32 %v1439, %v1410
    %v1444 = vsub.f32 %v1440, %v1411
    %v1445 = vsub.f32 %v1441, %v1412
    %v1446 = vsub.f32 %v1442, %v1413
    %v1447 = vsub.f32 %v1300, %v1007
    %v1448 = vsub.f32 %v1301, %v1008
    %v1449 = vsub.f32 %v1302, %v1009
    %v1450 = vsub.f32 %v1303, %v1010
    %v1451 = vsub.f32 %v1304, %v1012
    %v1452 = vsub.f32 %v1305, %v1013
    %v1453 = vsub.f32 %v1306, %v1014
    %v1454 = vsub.f32 %v1307, %v1015
    %v1455 = vmul.f32 %v1447, %v1447
    %v1456 = vmul.f32 %v1448, %v1448
    %v1457 = vmul.f32 %v1449, %v1449
    %v1458 = vmul.f32 %v1450, %v1450
    %v1459 = vmul.f32 %v1455, %v1183
    %v1460 = vmul.f32 %v1456, %v1185
    %v1461 = vmul.f32 %v1457, %v1187
    %v1462 = vmul.f32 %v1458, %v1189
    %v1463 = vmul.f32 %v1451, %v1451
    %v1464 = vmul.f32 %v1452, %v1452
    %v1465 = vmul.f32 %v1453, %v1453
    %v1466 = vmul.f32 %v1454, %v1454
    %v1467 = vmul.f32 %v1463, %v1195
    %v1468 = vmul.f32 %v1464, %v1197
    %v1469 = vmul.f32 %v1465, %v1199
    %v1470 = vmul.f32 %v1466, %v1201
    %v1471 = vadd.f32 %v1459, %v1467
    %v1472 = vadd.f32 %v1460, %v1468
    %v1473 = vadd.f32 %v1461, %v1469
    %v1474 = vadd.f32 %v1462, %v1470
    %v1475 = vadd.f32 %v1047, %v1052
    %v1476 = vadd.f32 %v1048, %v1053
    %v1477 = vadd.f32 %v1049, %v1054
    %v1478 = vadd.f32 %v1050, %v1055
    %s1479 = scalar_lea.vmem [#allocation2], 576
    %v1480 = vld [vmem:[%s1479] sm:$0xff]
    %v1481 = vld [vmem:[%s1479 + $0x8] sm:$0xff]
    %v1482 = vld [vmem:[%s1479 + $0x10] sm:$0xff]
    %v1483 = vld [vmem:[%s1479 + $0x18] sm:$0xff]
    %v1484 = vadd.f32 %v1480, 1e-05
    %v1485 = vadd.f32 %v1481, 1e-05
    %v1486 = vadd.f32 %v1482, 1e-05
    %v1487 = vadd.f32 %v1483, 1e-05
    %v1488 = vlog2.pop %v1484
    %v1489 = vmul.f32 %v1488, 0.6931472
    %v1490 = vlog2.pop %v1485
    %v1491 = vmul.f32 %v1490, 0.6931472
    %v1492 = vlog2.pop %v1486
    %v1493 = vmul.f32 %v1492, 0.6931472
    %v1494 = vlog2.pop %v1487
    %v1495 = vmul.f32 %v1494, 0.6931472
    %v1496 = vadd.f32 %v1489, -1.837877
    %v1497 = vadd.f32 %v1491, -1.837877
    %v1498 = vadd.f32 %v1493, -1.837877
    %v1499 = vadd.f32 %v1495, -1.837877
    %v1500 = vmul.f32 %v1471, 0.5
    %v1501 = vmul.f32 %v1472, 0.5
    %v1502 = vmul.f32 %v1473, 0.5
    %v1503 = vmul.f32 %v1474, 0.5
    %v1504 = vsub.f32 %v1496, %v1500
    %v1505 = vsub.f32 %v1497, %v1501
    %v1506 = vsub.f32 %v1498, %v1502
    %v1507 = vsub.f32 %v1499, %v1503
    %v1508 = vsub.f32 %v1504, %v1475
    %v1509 = vsub.f32 %v1505, %v1476
    %v1510 = vsub.f32 %v1506, %v1477
    %v1511 = vsub.f32 %v1507, %v1478
    %v1512 = vsub.f32 %v1300, %v1017
    %v1513 = vsub.f32 %v1301, %v1018
    %v1514 = vsub.f32 %v1302, %v1019
    %v1515 = vsub.f32 %v1303, %v1020
    %v1516 = vsub.f32 %v1304, %v1022
    %v1517 = vsub.f32 %v1305, %v1023
    %v1518 = vsub.f32 %v1306, %v1024
    %v1519 = vsub.f32 %v1307, %v1025
    %v1520 = vmul.f32 %v1512, %v1512
    %v1521 = vmul.f32 %v1513, %v1513
    %v1522 = vmul.f32 %v1514, %v1514
    %v1523 = vmul.f32 %v1515, %v1515
    %v1524 = vmul.f32 %v1520, %v1207
    %v1525 = vmul.f32 %v1521, %v1209
    %v1526 = vmul.f32 %v1522, %v1211
    %v1527 = vmul.f32 %v1523, %v1213
    %v1528 = vmul.f32 %v1516, %v1516
    %v1529 = vmul.f32 %v1517, %v1517
    %v1530 = vmul.f32 %v1518, %v1518
    %v1531 = vmul.f32 %v1519, %v1519
    %v1532 = vmul.f32 %v1528, %v1219
    %v1533 = vmul.f32 %v1529, %v1221
    %v1534 = vmul.f32 %v1530, %v1223
    %v1535 = vmul.f32 %v1531, %v1225
    %v1536 = vadd.f32 %v1524, %v1532
    %v1537 = vadd.f32 %v1525, %v1533
    %v1538 = vadd.f32 %v1526, %v1534
    %v1539 = vadd.f32 %v1527, %v1535
    %v1540 = vadd.f32 %v1057, %v1062
    %v1541 = vadd.f32 %v1058, %v1063
    %v1542 = vadd.f32 %v1059, %v1064
    %v1543 = vadd.f32 %v1060, %v1065
    %s1544 = scalar_lea.vmem [#allocation2], 608
    %v1545 = vld [vmem:[%s1544] sm:$0xff]
    %v1546 = vld [vmem:[%s1544 + $0x8] sm:$0xff]
    %v1547 = vld [vmem:[%s1544 + $0x10] sm:$0xff]
    %v1548 = vld [vmem:[%s1544 + $0x18] sm:$0xff]
    %v1549 = vadd.f32 %v1545, 1e-05
    %v1550 = vadd.f32 %v1546, 1e-05
    %v1551 = vadd.f32 %v1547, 1e-05
    %v1552 = vadd.f32 %v1548, 1e-05
    %v1553 = vlog2.pop %v1549
    %v1554 = vmul.f32 %v1553, 0.6931472
    %v1555 = vlog2.pop %v1550
    %v1556 = vmul.f32 %v1555, 0.6931472
    %v1557 = vlog2.pop %v1551
    %v1558 = vmul.f32 %v1557, 0.6931472
    %v1559 = vlog2.pop %v1552
    %v1560 = vmul.f32 %v1559, 0.6931472
    %v1561 = vadd.f32 %v1554, -1.837877
    %v1562 = vadd.f32 %v1556, -1.837877
    %v1563 = vadd.f32 %v1558, -1.837877
    %v1564 = vadd.f32 %v1560, -1.837877
    %v1565 = vmul.f32 %v1536, 0.5
    %v1566 = vmul.f32 %v1537, 0.5
    %v1567 = vmul.f32 %v1538, 0.5
    %v1568 = vmul.f32 %v1539, 0.5
    %v1569 = vsub.f32 %v1561, %v1565
    %v1570 = vsub.f32 %v1562, %v1566
    %v1571 = vsub.f32 %v1563, %v1567
    %v1572 = vsub.f32 %v1564, %v1568
    %v1573 = vsub.f32 %v1569, %v1540
    %v1574 = vsub.f32 %v1570, %v1541
    %v1575 = vsub.f32 %v1571, %v1542
    %v1576 = vsub.f32 %v1572, %v1543
    %v1577 = vmul.f32 %v1300, %v1300
    %v1578 = vmul.f32 %v1301, %v1301
    %v1579 = vmul.f32 %v1302, %v1302
    %v1580 = vmul.f32 %v1303, %v1303
    %v1581 = vmul.f32 %v1304, %v1304
    %v1582 = vmul.f32 %v1305, %v1305
    %v1583 = vmul.f32 %v1306, %v1306
    %v1584 = vmul.f32 %v1307, %v1307
    %v1585 = vadd.f32 %v1577, %v1581
    %v1586 = vadd.f32 %v1578, %v1582
    %v1587 = vadd.f32 %v1579, %v1583
    %v1588 = vadd.f32 %v1580, %v1584
    %vm1589 = vcmp.gt.f32.partialorder %v1585, 1.0
    %vm1590 = vcmp.gt.f32.partialorder %v1586, 1.0
    %vm1591 = vcmp.gt.f32.partialorder %v1587, 1.0
    %vm1592 = vcmp.gt.f32.partialorder %v1588, 1.0
    %v1593 = vsel %vm1589, -11.512925, -1.1446985
    %v1594 = vsel %vm1590, -11.512925, -1.1446985
    %v1595 = vsel %vm1591, -11.512925, -1.1446985
    %v1596 = vsel %vm1592, -11.512925, -1.1446985
    %v1597 = vlog2.pop %v24
    %v1598 = vmul.f32 %v1597, 0.6931472
    %v1599 = vlog2.pop %v25
    %v1600 = vmul.f32 %v1599, 0.6931472
    %v1601 = vlog2.pop %v26
    %v1602 = vmul.f32 %v1601, 0.6931472
    %v1603 = vlog2.pop %v27
    %v1604 = vmul.f32 %v1603, 0.6931472
    %v1605 = vadd.f32 %v1593, %v1598
    %v1606 = vadd.f32 %v1594, %v1600
    %v1607 = vadd.f32 %v1595, %v1602
    %v1608 = vadd.f32 %v1596, %v1604
    %v1609 = vmax.f32 %v1378, %v1443
    %v1610 = vmax.f32 %v1379, %v1444
    %v1611 = vmax.f32 %v1380, %v1445
    %v1612 = vmax.f32 %v1381, %v1446
    %v1613 = vmax.f32 %v1609, %v1508
    %v1614 = vmax.f32 %v1610, %v1509
    %v1615 = vmax.f32 %v1611, %v1510
    %v1616 = vmax.f32 %v1612, %v1511
    %v1617 = vmax.f32 %v1613, %v1573
    %v1618 = vmax.f32 %v1614, %v1574
    %v1619 = vmax.f32 %v1615, %v1575
    %v1620 = vmax.f32 %v1616, %v1576
    %v1621 = vmax.f32 %v1617, %v1605
    %v1622 = vmax.f32 %v1618, %v1606
    %v1623 = vmax.f32 %v1619, %v1607
    %v1624 = vmax.f32 %v1620, %v1608
    %v1625 = vsub.f32 %v1378, %v1621
    %v1626 = vsub.f32 %v1379, %v1622
    %v1627 = vsub.f32 %v1380, %v1623
    %v1628 = vsub.f32 %v1381, %v1624
    %v1629 = vmul.f32 %v1625, 1.442695
    %v1630 = vpow.pop %v1629
    %v1631 = vmul.f32 %v1626, 1.442695
    %v1632 = vpow.pop %v1631
    %v1633 = vmul.f32 %v1627, 1.442695
    %v1634 = vpow.pop %v1633
    %v1635 = vmul.f32 %v1628, 1.442695
    %v1636 = vpow.pop %v1635
    %v1637 = vsub.f32 %v1443, %v1621
    %v1638 = vsub.f32 %v1444, %v1622
    %v1639 = vsub.f32 %v1445, %v1623
    %v1640 = vsub.f32 %v1446, %v1624
    %v1641 = vmul.f32 %v1637, 1.442695
    %v1642 = vpow.pop %v1641
    %v1643 = vmul.f32 %v1638, 1.442695
    %v1644 = vpow.pop %v1643
    %v1645 = vmul.f32 %v1639, 1.442695
    %v1646 = vpow.pop %v1645
    %v1647 = vmul.f32 %v1640, 1.442695
    %v1648 = vpow.pop %v1647
    %v1649 = vadd.f32 %v1630, %v1642
    %v1650 = vadd.f32 %v1632, %v1644
    %v1651 = vadd.f32 %v1634, %v1646
    %v1652 = vadd.f32 %v1636, %v1648
    %v1653 = vsub.f32 %v1508, %v1621
    %v1654 = vsub.f32 %v1509, %v1622
    %v1655 = vsub.f32 %v1510, %v1623
    %v1656 = vsub.f32 %v1511, %v1624
    %v1657 = vmul.f32 %v1653, 1.442695
    %v1658 = vpow.pop %v1657
    %v1659 = vmul.f32 %v1654, 1.442695
    %v1660 = vpow.pop %v1659
    %v1661 = vmul.f32 %v1655, 1.442695
    %v1662 = vpow.pop %v1661
    %v1663 = vmul.f32 %v1656, 1.442695
    %v1664 = vpow.pop %v1663
    %v1665 = vadd.f32 %v1649, %v1658
    %v1666 = vadd.f32 %v1650, %v1660
    %v1667 = vadd.f32 %v1651, %v1662
    %v1668 = vadd.f32 %v1652, %v1664
    %v1669 = vsub.f32 %v1573, %v1621
    %v1670 = vsub.f32 %v1574, %v1622
    %v1671 = vsub.f32 %v1575, %v1623
    %v1672 = vsub.f32 %v1576, %v1624
    %v1673 = vmul.f32 %v1669, 1.442695
    %v1674 = vpow.pop %v1673
    %v1675 = vmul.f32 %v1670, 1.442695
    %v1676 = vpow.pop %v1675
    %v1677 = vmul.f32 %v1671, 1.442695
    %v1678 = vpow.pop %v1677
    %v1679 = vmul.f32 %v1672, 1.442695
    %v1680 = vpow.pop %v1679
    %v1681 = vadd.f32 %v1665, %v1674
    %v1682 = vadd.f32 %v1666, %v1676
    %v1683 = vadd.f32 %v1667, %v1678
    %v1684 = vadd.f32 %v1668, %v1680
    %v1685 = vsub.f32 %v1605, %v1621
    %v1686 = vsub.f32 %v1606, %v1622
    %v1687 = vsub.f32 %v1607, %v1623
    %v1688 = vsub.f32 %v1608, %v1624
    %v1689 = vmul.f32 %v1685, 1.442695
    %v1690 = vpow.pop %v1689
    %v1691 = vmul.f32 %v1686, 1.442695
    %v1692 = vpow.pop %v1691
    %v1693 = vmul.f32 %v1687, 1.442695
    %v1694 = vpow.pop %v1693
    %v1695 = vmul.f32 %v1688, 1.442695
    %v1696 = vpow.pop %v1695
    %v1697 = vadd.f32 %v1681, %v1690
    %v1698 = vadd.f32 %v1682, %v1692
    %v1699 = vadd.f32 %v1683, %v1694
    %v1700 = vadd.f32 %v1684, %v1696
    %v1701 = vlog2.pop %v1697
    %v1702 = vmul.f32 %v1701, 0.6931472
    %v1703 = vlog2.pop %v1698
    %v1704 = vmul.f32 %v1703, 0.6931472
    %v1705 = vlog2.pop %v1699
    %v1706 = vmul.f32 %v1705, 0.6931472
    %v1707 = vlog2.pop %v1700
    %v1708 = vmul.f32 %v1707, 0.6931472
    %v1709 = vadd.f32 %v1621, %v1702
    %v1710 = vadd.f32 %v1622, %v1704
    %v1711 = vadd.f32 %v1623, %v1706
    %v1712 = vadd.f32 %v1624, %v1708
    %s1713 = scalar_lea.vmem [#allocation5], 64
    %1714 = vst [vmem:[%s1713] sm:$0xff] %v1709
    %1715 = vst [vmem:[%s1713 + $0x8] sm:$0xff] %v1710
    %1716 = vst [vmem:[%s1713 + $0x10] sm:$0xff] %v1711
    %1717 = vst [vmem:[%s1713 + $0x18] sm:$0xff] %v1712
    // Predicated region
    $region10: #{tpu_custom_call.1} parent=1 // pred_check
      _
    $region11: #{tpu_custom_call.1} parent=1 // pred_check_branch
      %1719 = sbr.rel (0) target = $region13
    $region12: #{tpu_custom_call.1} parent=1 // pred_region
      %s1721 = ssub.s32 1536, 1536
      %1722 = vsyncadd [#allocation4], %s1721
      %s1723 = sshll.u32 [#allocation5], 4
      %s1724 = int_to_ptr.vmem [resolvable:$true] %s1723
      %1729 = dma.vmem_to_hbm [thread:$0]  %s1724, 1536, %s1, [#allocation4], 512, 512, 32
    $region13: #{tpu_custom_call.1} parent=1 // pred_fallthru
      _
    // Predicated region
    $region14: #{tpu_custom_call.1} parent=1 // pred_check
      _
    $region15: #{tpu_custom_call.1} parent=1 // pred_check_branch
      %1731 = sbr.rel (0) target = $region17
    $region16: #{tpu_custom_call.1} parent=1 // pred_region
      %1732 = dma.done [#allocation4], 1536
    $region17: #{tpu_custom_call.1} parent=1 // pred_fallthru
      _
    %1733 = vsyncpa [#allocation3], 1
    %1734 = vsyncpa [#allocation4], 1

</llo_original>
